<compile_context>
chip_gen: v6e
topology: v6e:2x2x1
jax: 0.10.0
libtpu: 0.0.40
codegen_flags: <defaults>
</compile_context>

<pallas_src>
import functools
import math

import numpy as np
import jax
import jax.numpy as jnp
from jax.experimental import pallas as pl
from jax.experimental.pallas import tpu as pltpu


_S_LANES = 128  # lane width of the sm_norm output slab (lane-dense stores)


# ------------------------------ Pallas kernel ------------------------------ #

def _attn_kernel(*refs, nb, d_k_pad, d_v_pad, causal, has_bias, compute_dtype,
                 s_lanes):
    if has_bias:
        x_ref, w_ref, mb_ref, att_ref, s_ref = refs
    else:
        x_ref, w_ref, att_ref, s_ref = refs
        mb_ref = None
    L = x_ref.shape[1]

    w = w_ref[...]                                    # (E, F), compute_dtype

    # Grid-invariant mask / bias, hoisted out of the per-segment loop.
    if has_bias:
        mb = mb_ref[...]                              # (L, L) f32 additive mask+bias (pre-scaled)
        keep = None
    elif causal:
        q_idx = jax.lax.broadcasted_iota(jnp.int32, (L, L), 0)   # query (row)
        k_idx = jax.lax.broadcasted_iota(jnp.int32, (L, L), 1)   # key   (col)
        keep = q_idx <= k_idx
        mb = None
    else:
        keep = None
        mb = None

    def body(b, carry):
        xb = x_ref[b]                                             # (L, E)
        # Fused QKV projection (norm_fact pre-folded into the Wq columns).
        qkv = jnp.dot(xb, w, preferred_element_type=jnp.float32)  # (L, F) f32
        q = qkv[:, :d_k_pad].astype(compute_dtype)                # lane-aligned slices
        k = qkv[:, d_k_pad:2 * d_k_pad].astype(compute_dtype)
        v = qkv[:, 2 * d_k_pad:]                                  # (L, d_v_pad) f32

        # Scores in (query-row, key-col) layout: z[c, a] = q_c . k_a  (natural MXU).
        z = jax.lax.dot_general(q, k, (((1,), (1,)), ((), ())),
                                preferred_element_type=jnp.float32)  # (L, L)
        if has_bias:
            z = z + mb
        elif causal:
            z = jnp.where(keep, z, jnp.float32(-1e30))

        # Softmax over the *query* axis (torch dim-3 softmax): per key column.
        zmax = jnp.max(z, axis=0, keepdims=True)                  # (1, L)
        ez = jnp.exp(z - zmax)                                    # (L, L)
        s_row = jnp.sum(ez, axis=0, keepdims=True)                # (1, L) denom per key
        s_col = jnp.transpose(s_row)                              # (L, 1) tiny transpose

        # att * sm_norm == (ez @ (V / s_key)) * s_query  (exact; scales the
        # (L, d_v) value matrix instead of the (L, L) probability matrix).
        v_scaled = (v * (1.0 / s_col)).astype(compute_dtype)      # (L, d_v_pad)
        att = jnp.dot(ez.astype(compute_dtype), v_scaled,
                      preferred_element_type=jnp.float32)         # (L, d_v_pad)

        att_ref[b] = att * s_col                                  # pre-weighted output
        s_ref[b] = jnp.broadcast_to(s_col, (L, s_lanes))          # lane-dense sm_norm slab
        return carry

    jax.lax.fori_loop(0, nb, body, 0)


# ----------------------------- pallas_call glue ----------------------------- #

def _round_up(x, m):
    return -(-x // m) * m


def _vmem_capacity_bytes():
    try:
        info = pltpu.get_tpu_info()
        for name in ("vmem_capacity_bytes", "vmem_bytes", "vmem_size_bytes"):
            v = getattr(info, name, None)
            if v:
                return int(v)
    except Exception:
        pass
    return 64 * 1024 * 1024            # conservative default (v7x per-TC)


def _pick_nb(n_seg, L, E, F, d_k_pad, d_v_pad, s_lanes, in_bytes, has_bias,
             vmem_budget):
    """Segments per grid step: ~1024 rows/step, grid >= 2 steps when possible
    (dual-TC chips), and block buffers kept under the VMEM budget."""
    fixed = 2 * E * F * in_bytes                               # fused weight (dbl-buffered)
    if has_bias:
        fixed += 2 * L * L * 4                                 # (L, L) mask+bias tile
    # per-iteration temporaries (do not scale with nb): z, ez, keep, qkv, q/k/v
    fixed += 3 * L * L * 4 + L * F * 4 + 2 * L * d_k_pad * in_bytes \
        + 2 * L * (d_v_pad + s_lanes) * 4
    per_seg = 2 * L * (E * in_bytes + (d_v_pad + s_lanes) * 4)  # x + outputs, dbl-buffered

    nb = max(1, 1024 // max(L, 1))
    if n_seg >= 2:
        nb = min(nb, -(-n_seg // 2))
    nb = max(1, min(nb, n_seg))
    while nb > 1 and fixed + nb * per_seg > vmem_budget:
        nb = max(1, nb // 2)
    return nb


def _attention_segments_pallas(x_seg, w_cat, mb, d_k_pad, d_v_pad, causal,
                               compute_dtype):
    """x_seg: (n_segments, L, E) dilated/segmented rows.  Returns
    (att * sm_norm) of shape (n_segments, L, d_v_pad) and sm_norm broadcast to
    a 128-lane slab of shape (n_segments, L, 128)."""
    n_seg, L, E = x_seg.shape
    F = w_cat.shape[1]
    in_bytes = jnp.dtype(compute_dtype).itemsize

    cap = _vmem_capacity_bytes()
    vmem_limit = max(32 << 20, min((cap * 3) // 4, 96 << 20))
    nb = _pick_nb(n_seg, L, E, F, d_k_pad, d_v_pad, _S_LANES, in_bytes,
                  mb is not None, int(vmem_limit * 0.8))

    n_seg_pad = _round_up(n_seg, nb)
    if n_seg_pad != n_seg:
        x_seg = jnp.pad(x_seg, ((0, n_seg_pad - n_seg), (0, 0), (0, 0)))
    grid = (n_seg_pad // nb,)

    in_specs = [pl.BlockSpec((nb, L, E), lambda i: (i, 0, 0)),
                pl.BlockSpec((E, F), lambda i: (0, 0))]
    args = [x_seg, w_cat]
    if mb is not None:
        in_specs.append(pl.BlockSpec((L, L), lambda i: (0, 0)))
        args.append(mb)

    kernel = functools.partial(
        _attn_kernel, nb=nb, d_k_pad=d_k_pad, d_v_pad=d_v_pad, causal=causal,
        has_bias=mb is not None, compute_dtype=compute_dtype, s_lanes=_S_LANES)

    att, s = pl.pallas_call(
        kernel,
        out_shape=(jax.ShapeDtypeStruct((n_seg_pad, L, d_v_pad), jnp.float32),
                   jax.ShapeDtypeStruct((n_seg_pad, L, _S_LANES), jnp.float32)),
        grid=grid,
        in_specs=in_specs,
        out_specs=(pl.BlockSpec((nb, L, d_v_pad), lambda i: (i, 0, 0)),
                   pl.BlockSpec((nb, L, _S_LANES), lambda i: (i, 0, 0))),
        compiler_params=pltpu.CompilerParams(
            dimension_semantics=("parallel",),
            vmem_limit_bytes=int(vmem_limit)),
    )(*args)
    # TODO(synk): for very large per-segment lengths (L >~ 2048) the (L, L)
    # score block should be flash-style tiled along the key axis (v7x 64 MiB).
    return att[:n_seg], s[:n_seg]


# ------------------------------- JAX wrapper -------------------------------- #

@functools.partial(jax.jit, static_argnames=(
    "dilation_schedule", "segment_schedule", "is_causal", "compute_dtype"))
def multihead_dilated_attention(x, Wk, Wq, Wv, *, dilation_schedule,
                                segment_schedule, is_causal=True,
                                positional_embeddings_KQ=None,
                                pos_emb_scaling=None, W_out=None,
                                compute_dtype=jnp.float32):
    """MultiHeadDilatedAttentionV1 forward ('softmax_denom' aggregation)."""
    B, T, E = x.shape
    d_k = Wq.shape[1]
    d_v = Wv.shape[1]
    d_k_pad = _round_up(d_k, 128)
    d_v_pad = _round_up(d_v, 128)
    F = 2 * d_k_pad + d_v_pad
    norm_fact = 1.0 / math.sqrt(d_k)

    x_out = jnp.zeros((B, T, d_v), jnp.float32)
    s_acc = jnp.zeros((B, T, 1), jnp.float32)
    x_c = x.astype(compute_dtype)

    cum_scale = 1.0           # torch scales the shared P tensor in place (cumulative)
    for h, (dil, sc) in enumerate(zip(dilation_schedule, segment_schedule)):
        segm = T // sc
        L = -(-segm // dil)

        # Dilated / segmented gather (strided slice + transpose; fused by XLA
        # under jit).  TODO(synk): a fully in-kernel strided gather is not
        # expressible with a rectangular BlockSpec index_map.
        xv = x_c.reshape(B, segm, sc, E)[:, ::dil]                 # (B, L, sc, E)
        x_seg = jnp.transpose(xv, (0, 2, 1, 3)).reshape(B * sc, L, E)

        # Fused per-head QKV weight with 128-lane-aligned blocks; norm_fact is
        # folded into the Wq columns.
        w_cat = jnp.zeros((E, F), jnp.float32)
        w_cat = w_cat.at[:, :d_k].set(Wq[h].T * jnp.float32(norm_fact))
        w_cat = w_cat.at[:, d_k_pad:d_k_pad + d_k].set(Wk[h].T)
        w_cat = w_cat.at[:, 2 * d_k_pad:2 * d_k_pad + d_v].set(Wv[h].T)
        w_cat = w_cat.astype(compute_dtype)

        mb = None
        if positional_embeddings_KQ is not None:
            scale = 1.0 if pos_emb_scaling is None else pos_emb_scaling[h]
            cum_scale = cum_scale * scale
            p_dil = positional_embeddings_KQ[:segm, :segm][::dil, ::dil]
            # (query-row, key-col) layout; pre-scaled by norm_fact and the
            # cumulative per-head scaling; combined with the causal mask (f32).
            bias = (jnp.transpose(p_dil).astype(jnp.float32)
                    * (jnp.float32(norm_fact) * cum_scale))
            if is_causal:
                keep = np.triu(np.ones((L, L), dtype=bool))        # query <= key
                mb = jnp.where(keep, bias, jnp.float32(-1e30))
            else:
                mb = bias

        att, s = _attention_segments_pallas(
            x_seg, w_cat, mb, d_k_pad, d_v_pad, is_causal, compute_dtype)

        att = att[:, :, :d_v].reshape(B, sc * L, d_v)              # att * sm_norm
        s = s[:, :, :1].reshape(B, sc * L, 1)                      # sm_norm
        x_out = x_out.at[:, ::dil, :].add(att)
        s_acc = s_acc.at[:, ::dil, :].add(s)

    # LongNet eq. 10 aggregation.  NOTE: positions not covered by any head
    # (all dilations > 1) are 0/0 = NaN, exactly like the torch module.
    out = x_out / s_acc
    if W_out is not None:
        out = jnp.dot(out, W_out.T)        # dense_out (bias-free linear_out)
    # TODO(synk): dropout (train-time only), the 'concat' aggregation path,
    # the intermediate-output dict, and folding all heads into one kernel grid
    # are not implemented.
    return out


# ---------------------------- pure-JAX reference ---------------------------- #

def _reference_forward(x, Wk, Wq, Wv, dilation_schedule, segment_schedule,
                       is_causal=True, positional_embeddings_KQ=None,
                       pos_emb_scaling=None, W_out=None):
    """Faithful pure-JAX translation of the torch module (softmax_denom)."""
    B, T, E = x.shape
    d_v = Wv.shape[1]
    d_k = Wq.shape[1]
    norm_fact = 1.0 / math.sqrt(d_k)
    x_out = jnp.zeros((B, T, d_v), jnp.float32)
    s_acc = jnp.zeros((B, T, d_v), jnp.float32)
    causal = np.tril(np.ones((T, T), dtype=bool))
    cum = 1.0
    for h, (dil, sc) in enumerate(zip(dilation_schedule, segment_schedule)):
        segm = T // sc
        xv = jnp.transpose(x.reshape(B, segm, sc, E), (0, 2, 3, 1))  # (B,c,E,t)
        xs = xv[:, :, :, ::dil]                                      # (B,c,E,L)
        Q = jnp.einsum('ijkl,mk->ijlm', xs, Wq[h])
        K = jnp.einsum('ijkl,mk->ijlm', xs, Wk[h])
        V = jnp.einsum('ijkl,mk->ijlm', xs, Wv[h])
        KQ = jnp.einsum('ijkl,ijml->ijkm', K, Q)
        if is_causal:
            m = causal[:segm, :segm][::dil, ::dil]
            KQ = jnp.where(m, KQ, -jnp.inf)
        if positional_embeddings_KQ is not None:
            scale = 1.0 if pos_emb_scaling is None else pos_emb_scaling[h]
            cum = cum * scale                      # torch: P scaled in place per head
            KQ = KQ + (positional_embeddings_KQ * cum)[:segm, :segm][::dil, ::dil]
        z = KQ * norm_fact
        mx = jnp.max(z, axis=3, keepdims=True)
        e = jnp.exp(z - mx)
        s = jnp.sum(e, axis=3, keepdims=True)
        sm = e / s
        att = jnp.einsum('ijnm,ijnk->ijmk', sm, V)
        L = att.shape[2]
        att_f = att.reshape(B, sc * L, d_v)
        s_f = s.reshape(B, sc * L, 1)
        x_out = x_out.at[:, ::dil, :].add(att_f * s_f)
        s_acc = s_acc.at[:, ::dil, :].add(
            jnp.broadcast_to(s_f, (B, sc * L, d_v)))
    out = x_out / s_acc
    if W_out is not None:
        out = out @ W_out.T
    return out


# ----------------------------------- main ----------------------------------- #

if __name__ == "__main__":
    B, T, E = 2, 16, 8
    d_k = d_v = 8
    dil_sched = (1, 2)
    seg_sched = (2, 4)
    H = len(dil_sched)

    key = jax.random.PRNGKey(0)
    kx, kk, kq, kv, kp, ko = jax.random.split(key, 6)
    x = jax.random.normal(kx, (B, T, E), jnp.float32)
    # Parameter init mirrors torch: randn(d_k, d_model) / sqrt(d_k), per head.
    Wk = jax.random.normal(kk, (H, d_k, E), jnp.float32) / np.sqrt(d_k)
    Wq = jax.random.normal(kq, (H, d_k, E), jnp.float32) / np.sqrt(d_k)
    Wv = jax.random.normal(kv, (H, d_v, E), jnp.float32) / np.sqrt(d_k)
    W_out = jax.random.normal(ko, (E, d_v), jnp.float32) / np.sqrt(d_v)
    P = 0.1 * jax.random.normal(kp, (T, T), jnp.float32)
    pos_scaling = (1.0, 0.5)

    # Case 1: f32 MXU operands, no positional bias (tight check).
    out1 = multihead_dilated_attention(
        x, Wk, Wq, Wv, dilation_schedule=dil_sched, segment_schedule=seg_sched,
        is_causal=True, W_out=W_out, compute_dtype=jnp.float32)
    out1 = jax.block_until_ready(out1)
    ref1 = _reference_forward(x, Wk, Wq, Wv, dil_sched, seg_sched,
                              is_causal=True, W_out=W_out)
    np.testing.assert_allclose(np.asarray(out1), np.asarray(ref1),
                               rtol=2e-4, atol=2e-4)

    # Case 2: bf16 MXU operands + positional bias (looser check: bf16 inputs).
    out2 = multihead_dilated_attention(
        x, Wk, Wq, Wv, dilation_schedule=dil_sched, segment_schedule=seg_sched,
        is_causal=True, positional_embeddings_KQ=P, pos_emb_scaling=pos_scaling,
        W_out=W_out, compute_dtype=jnp.bfloat16)
    out2 = jax.block_until_ready(out2)
    ref2 = _reference_forward(x, Wk, Wq, Wv, dil_sched, seg_sched,
                              is_causal=True, positional_embeddings_KQ=P,
                              pos_emb_scaling=pos_scaling, W_out=W_out)
    np.testing.assert_allclose(np.asarray(out2), np.asarray(ref2),
                               rtol=1e-1, atol=1e-1)

    assert out1.shape == (B, T, E)
    assert bool(jnp.all(jnp.isfinite(out1)))
    print("KERNEL_OK")
</pallas_src>

<mosaic_0001>
module attributes {stable_mosaic.version = 11 : i64} {
  func.func @_attn_kernel(%arg0: i32, %arg1: memref<4x2x8xf32, #tpu.memory_space<vmem>>, %arg2: memref<8x384xf32, #tpu.memory_space<vmem>>, %arg3: memref<4x2x128xf32, #tpu.memory_space<vmem>>, %arg4: memref<4x2x128xf32, #tpu.memory_space<vmem>>) attributes {dimension_semantics = [#tpu.dimension_semantics<parallel>], iteration_bounds = array<i64: 2>, scalar_prefetch = 0 : i64, scratch_operands = 0 : i64, tpu.core_type = #tpu.core_type<tc>, window_params = [{transform_indices = @transform_0, window_bounds = array<i64: 4, 2, 8>}, {pipeline_mode = #tpu.pipeline_mode<synchronous>, transform_indices = @transform_1, window_bounds = array<i64: 8, 384>}, {transform_indices = @transform_2, window_bounds = array<i64: 4, 2, 128>}, {transform_indices = @transform_3, window_bounds = array<i64: 4, 2, 128>}]} {
    %c0 = arith.constant 0 : index
    %c0_0 = arith.constant 0 : index
    %0 = vector.load %arg2[%c0, %c0_0] : memref<8x384xf32, #tpu.memory_space<vmem>>, vector<8x384xf32>
    %1 = tpu.iota {dimensions = array<i32: 0>} : vector<2x2xi32>
    %2 = tpu.iota {dimensions = array<i32: 1>} : vector<2x2xi32>
    %3 = arith.cmpi sle, %1, %2 : vector<2x2xi32>
    %c0_i32 = arith.constant 0 : i32
    %c4_i32 = arith.constant 4 : i32
    %4 = arith.addi %c0_i32, %c4_i32 : i32
    %c1_i32 = arith.constant 1 : i32
    scf.for %arg5 = %c0_i32 to %4 step %c1_i32  : i32 {
      %5 = arith.index_cast %arg5 : i32 to index
      %c0_2 = arith.constant 0 : index
      %c0_3 = arith.constant 0 : index
      %6 = vector.load %arg1[%5, %c0_2, %c0_3] : memref<4x2x8xf32, #tpu.memory_space<vmem>>, vector<1x2x8xf32>
      %7 = vector.shape_cast %6 : vector<1x2x8xf32> to vector<2x8xf32>
      %cst = arith.constant dense<0.000000e+00> : vector<2x384xf32>
      %8 = tpu.matmul %7, %0, %cst {dimension_numbers = #tpu.dot_dimension_numbers<[1], [0], [0], [1], [0, 0, 1, 1], [], []>} : vector<2x8xf32>, vector<8x384xf32>, vector<2x384xf32> -> vector<2x384xf32>
      %9 = vector.extract_strided_slice %8 {offsets = [0, 0], sizes = [2, 128], strides = [1, 1]} : vector<2x384xf32> to vector<2x128xf32>
      %10 = vector.extract_strided_slice %8 {offsets = [0, 128], sizes = [2, 128], strides = [1, 1]} : vector<2x384xf32> to vector<2x128xf32>
      %11 = vector.extract_strided_slice %8 {offsets = [0, 256], sizes = [2, 128], strides = [1, 1]} : vector<2x384xf32> to vector<2x128xf32>
      %cst_4 = arith.constant dense<0.000000e+00> : vector<2x2xf32>
      %12 = tpu.matmul %9, %10, %cst_4 {dimension_numbers = #tpu.dot_dimension_numbers<[1], [1], [0], [0], [0, 0, 1, 0], [], []>} : vector<2x128xf32>, vector<2x128xf32>, vector<2x2xf32> -> vector<2x2xf32>
      %cst_5 = arith.constant -1.000000e+30 : f32
      %13 = vector.broadcast %cst_5 : f32 to vector<2x2xf32>
      %14 = arith.select %3, %12, %13 : vector<2x2xi1>, vector<2x2xf32>
      %cst_6 = arith.constant dense<0xFF800000> : vector<2xf32>
      %15 = vector.multi_reduction <maximumf>, %14, %cst_6 [0] : vector<2x2xf32> to vector<2xf32>
      %16 = vector.shape_cast %15 : vector<2xf32> to vector<1x2xf32>
      %17 = vector.broadcast %16 : vector<1x2xf32> to vector<2x2xf32>
      %18 = arith.subf %14, %17 : vector<2x2xf32>
      %19 = math.exp %18 : vector<2x2xf32>
      %cst_7 = arith.constant dense<0.000000e+00> : vector<2xf32>
      %20 = vector.multi_reduction <add>, %19, %cst_7 [0] : vector<2x2xf32> to vector<2xf32>
      %21 = vector.shape_cast %20 : vector<2xf32> to vector<1x2xf32>
      %22 = tpu.transpose %21, [1, 0] : vector<1x2xf32> -> vector<2x1xf32>
      %cst_8 = arith.constant 1.000000e+00 : f32
      %23 = vector.broadcast %cst_8 : f32 to vector<2x1xf32>
      %24 = arith.divf %23, %22 : vector<2x1xf32>
      %25 = vector.broadcast %24 : vector<2x1xf32> to vector<2x128xf32>
      %26 = arith.mulf %11, %25 : vector<2x128xf32>
      %cst_9 = arith.constant dense<0.000000e+00> : vector<2x128xf32>
      %27 = tpu.matmul %19, %26, %cst_9 {dimension_numbers = #tpu.dot_dimension_numbers<[1], [0], [0], [1], [0, 0, 1, 1], [], []>} : vector<2x2xf32>, vector<2x128xf32>, vector<2x128xf32> -> vector<2x128xf32>
      %28 = vector.broadcast %22 : vector<2x1xf32> to vector<2x128xf32>
      %29 = arith.mulf %27, %28 : vector<2x128xf32>
      %30 = arith.index_cast %arg5 : i32 to index
      %c0_10 = arith.constant 0 : index
      %c0_11 = arith.constant 0 : index
      %31 = vector.load %arg3[%30, %c0_10, %c0_11] : memref<4x2x128xf32, #tpu.memory_space<vmem>>, vector<1x2x128xf32>
      %32 = vector.shape_cast %31 : vector<1x2x128xf32> to vector<2x128xf32>
      %33 = vector.shape_cast %29 : vector<2x128xf32> to vector<1x2x128xf32>
      tpu.vector_store %arg3[%30, %c0_10, %c0_11], %33 {strides = array<i32>} : memref<4x2x128xf32, #tpu.memory_space<vmem>>, vector<1x2x128xf32>,
      %34 = vector.shape_cast %22 : vector<2x1xf32> to vector<2x1xf32>
      %35 = vector.broadcast %34 : vector<2x1xf32> to vector<2x128xf32>
      %36 = arith.index_cast %arg5 : i32 to index
      %c0_12 = arith.constant 0 : index
      %c0_13 = arith.constant 0 : index
      %37 = vector.load %arg4[%36, %c0_12, %c0_13] : memref<4x2x128xf32, #tpu.memory_space<vmem>>, vector<1x2x128xf32>
      %38 = vector.shape_cast %37 : vector<1x2x128xf32> to vector<2x128xf32>
      %39 = vector.shape_cast %35 : vector<2x128xf32> to vector<1x2x128xf32>
      tpu.vector_store %arg4[%36, %c0_12, %c0_13], %39 {strides = array<i32>} : memref<4x2x128xf32, #tpu.memory_space<vmem>>, vector<1x2x128xf32>,
    }
    %c4_i32_1 = arith.constant 4 : i32
    return
  }
  func.func @transform_0(%arg0: i32) -> (i32, i32, i32) {
    %c0_i32 = arith.constant 0 : i32
    %c0_i32_0 = arith.constant 0 : i32
    %c0_i32_1 = arith.constant 0 : i32
    return %arg0, %c0_i32, %c0_i32_0 : i32, i32, i32
  }
  func.func @transform_1(%arg0: i32) -> (i32, i32) {
    %c0_i32 = arith.constant 0 : i32
    %c0_i32_0 = arith.constant 0 : i32
    %c0_i32_1 = arith.constant 0 : i32
    return %c0_i32, %c0_i32_0 : i32, i32
  }
  func.func @transform_2(%arg0: i32) -> (i32, i32, i32) {
    %c0_i32 = arith.constant 0 : i32
    %c0_i32_0 = arith.constant 0 : i32
    %c0_i32_1 = arith.constant 0 : i32
    return %arg0, %c0_i32, %c0_i32_0 : i32, i32, i32
  }
  func.func @transform_3(%arg0: i32) -> (i32, i32, i32) {
    %c0_i32 = arith.constant 0 : i32
    %c0_i32_0 = arith.constant 0 : i32
    %c0_i32_1 = arith.constant 0 : i32
    return %arg0, %c0_i32, %c0_i32_0 : i32, i32, i32
  }
}

module attributes {stable_mosaic.version = 11 : i64} {
  func.func @_attn_kernel(%arg0: i32, %arg1: memref<2x8x8xf32, #tpu.memory_space<vmem>>, %arg2: memref<8x384xf32, #tpu.memory_space<vmem>>, %arg3: memref<2x8x128xf32, #tpu.memory_space<vmem>>, %arg4: memref<2x8x128xf32, #tpu.memory_space<vmem>>) attributes {dimension_semantics = [#tpu.dimension_semantics<parallel>], iteration_bounds = array<i64: 2>, scalar_prefetch = 0 : i64, scratch_operands = 0 : i64, tpu.core_type = #tpu.core_type<tc>, window_params = [{transform_indices = @transform_0, window_bounds = array<i64: 2, 8, 8>}, {pipeline_mode = #tpu.pipeline_mode<synchronous>, transform_indices = @transform_1, window_bounds = array<i64: 8, 384>}, {transform_indices = @transform_2, window_bounds = array<i64: 2, 8, 128>}, {transform_indices = @transform_3, window_bounds = array<i64: 2, 8, 128>}]} {
    %c0 = arith.constant 0 : index
    %c0_0 = arith.constant 0 : index
    %0 = vector.load %arg2[%c0, %c0_0] : memref<8x384xf32, #tpu.memory_space<vmem>>, vector<8x384xf32>
    %1 = tpu.iota {dimensions = array<i32: 0>} : vector<8x8xi32>
    %2 = tpu.iota {dimensions = array<i32: 1>} : vector<8x8xi32>
    %3 = arith.cmpi sle, %1, %2 : vector<8x8xi32>
    %c0_i32 = arith.constant 0 : i32
    %c2_i32 = arith.constant 2 : i32
    %4 = arith.addi %c0_i32, %c2_i32 : i32
    %c1_i32 = arith.constant 1 : i32
    scf.for %arg5 = %c0_i32 to %4 step %c1_i32  : i32 {
      %5 = arith.index_cast %arg5 : i32 to index
      %c0_2 = arith.constant 0 : index
      %c0_3 = arith.constant 0 : index
      %6 = vector.load %arg1[%5, %c0_2, %c0_3] : memref<2x8x8xf32, #tpu.memory_space<vmem>>, vector<1x8x8xf32>
      %7 = vector.shape_cast %6 : vector<1x8x8xf32> to vector<8x8xf32>
      %cst = arith.constant dense<0.000000e+00> : vector<8x384xf32>
      %8 = tpu.matmul %7, %0, %cst {dimension_numbers = #tpu.dot_dimension_numbers<[1], [0], [0], [1], [0, 0, 1, 1], [], []>} : vector<8x8xf32>, vector<8x384xf32>, vector<8x384xf32> -> vector<8x384xf32>
      %9 = vector.extract_strided_slice %8 {offsets = [0, 0], sizes = [8, 128], strides = [1, 1]} : vector<8x384xf32> to vector<8x128xf32>
      %10 = vector.extract_strided_slice %8 {offsets = [0, 128], sizes = [8, 128], strides = [1, 1]} : vector<8x384xf32> to vector<8x128xf32>
      %11 = vector.extract_strided_slice %8 {offsets = [0, 256], sizes = [8, 128], strides = [1, 1]} : vector<8x384xf32> to vector<8x128xf32>
      %cst_4 = arith.constant dense<0.000000e+00> : vector<8x8xf32>
      %12 = tpu.matmul %9, %10, %cst_4 {dimension_numbers = #tpu.dot_dimension_numbers<[1], [1], [0], [0], [0, 0, 1, 0], [], []>} : vector<8x128xf32>, vector<8x128xf32>, vector<8x8xf32> -> vector<8x8xf32>
      %cst_5 = arith.constant -1.000000e+30 : f32
      %13 = vector.broadcast %cst_5 : f32 to vector<8x8xf32>
      %14 = arith.select %3, %12, %13 : vector<8x8xi1>, vector<8x8xf32>
      %cst_6 = arith.constant dense<0xFF800000> : vector<8xf32>
      %15 = vector.multi_reduction <maximumf>, %14, %cst_6 [0] : vector<8x8xf32> to vector<8xf32>
      %16 = vector.shape_cast %15 : vector<8xf32> to vector<1x8xf32>
      %17 = vector.broadcast %16 : vector<1x8xf32> to vector<8x8xf32>
      %18 = arith.subf %14, %17 : vector<8x8xf32>
      %19 = math.exp %18 : vector<8x8xf32>
      %cst_7 = arith.constant dense<0.000000e+00> : vector<8xf32>
      %20 = vector.multi_reduction <add>, %19, %cst_7 [0] : vector<8x8xf32> to vector<8xf32>
      %21 = vector.shape_cast %20 : vector<8xf32> to vector<1x8xf32>
      %22 = tpu.transpose %21, [1, 0] : vector<1x8xf32> -> vector<8x1xf32>
      %cst_8 = arith.constant 1.000000e+00 : f32
      %23 = vector.broadcast %cst_8 : f32 to vector<8x1xf32>
      %24 = arith.divf %23, %22 : vector<8x1xf32>
      %25 = vector.broadcast %24 : vector<8x1xf32> to vector<8x128xf32>
      %26 = arith.mulf %11, %25 : vector<8x128xf32>
      %cst_9 = arith.constant dense<0.000000e+00> : vector<8x128xf32>
      %27 = tpu.matmul %19, %26, %cst_9 {dimension_numbers = #tpu.dot_dimension_numbers<[1], [0], [0], [1], [0, 0, 1, 1], [], []>} : vector<8x8xf32>, vector<8x128xf32>, vector<8x128xf32> -> vector<8x128xf32>
      %28 = vector.broadcast %22 : vector<8x1xf32> to vector<8x128xf32>
      %29 = arith.mulf %27, %28 : vector<8x128xf32>
      %30 = arith.index_cast %arg5 : i32 to index
      %c0_10 = arith.constant 0 : index
      %c0_11 = arith.constant 0 : index
      %31 = vector.load %arg3[%30, %c0_10, %c0_11] : memref<2x8x128xf32, #tpu.memory_space<vmem>>, vector<1x8x128xf32>
      %32 = vector.shape_cast %31 : vector<1x8x128xf32> to vector<8x128xf32>
      %33 = vector.shape_cast %29 : vector<8x128xf32> to vector<1x8x128xf32>
      tpu.vector_store %arg3[%30, %c0_10, %c0_11], %33 {strides = array<i32>} : memref<2x8x128xf32, #tpu.memory_space<vmem>>, vector<1x8x128xf32>,
      %34 = vector.shape_cast %22 : vector<8x1xf32> to vector<8x1xf32>
      %35 = vector.broadcast %34 : vector<8x1xf32> to vector<8x128xf32>
      %36 = arith.index_cast %arg5 : i32 to index
      %c0_12 = arith.constant 0 : index
      %c0_13 = arith.constant 0 : index
      %37 = vector.load %arg4[%36, %c0_12, %c0_13] : memref<2x8x128xf32, #tpu.memory_space<vmem>>, vector<1x8x128xf32>
      %38 = vector.shape_cast %37 : vector<1x8x128xf32> to vector<8x128xf32>
      %39 = vector.shape_cast %35 : vector<8x128xf32> to vector<1x8x128xf32>
      tpu.vector_store %arg4[%36, %c0_12, %c0_13], %39 {strides = array<i32>} : memref<2x8x128xf32, #tpu.memory_space<vmem>>, vector<1x8x128xf32>,
    }
    %c2_i32_1 = arith.constant 2 : i32
    return
  }
  func.func @transform_0(%arg0: i32) -> (i32, i32, i32) {
    %c0_i32 = arith.constant 0 : i32
    %c0_i32_0 = arith.constant 0 : i32
    %c0_i32_1 = arith.constant 0 : i32
    return %arg0, %c0_i32, %c0_i32_0 : i32, i32, i32
  }
  func.func @transform_1(%arg0: i32) -> (i32, i32) {
    %c0_i32 = arith.constant 0 : i32
    %c0_i32_0 = arith.constant 0 : i32
    %c0_i32_1 = arith.constant 0 : i32
    return %c0_i32, %c0_i32_0 : i32, i32
  }
  func.func @transform_2(%arg0: i32) -> (i32, i32, i32) {
    %c0_i32 = arith.constant 0 : i32
    %c0_i32_0 = arith.constant 0 : i32
    %c0_i32_1 = arith.constant 0 : i32
    return %arg0, %c0_i32, %c0_i32_0 : i32, i32, i32
  }
  func.func @transform_3(%arg0: i32) -> (i32, i32, i32) {
    %c0_i32 = arith.constant 0 : i32
    %c0_i32_0 = arith.constant 0 : i32
    %c0_i32_1 = arith.constant 0 : i32
    return %arg0, %c0_i32, %c0_i32_0 : i32, i32, i32
  }
}

</mosaic_0001>

<llo_original>
// kernel: multihead_dilated_attention.3
$region0: #{multihead_dilated_attention.3}
  #allocation0 [shape = 'u32[]', space=smem, size = 0x4, offset = 0x4, fixed_abs, tag = 'smem constant byte address 0x4 - core index']
  #allocation1 [shape = 'u32[144,128]{1,0:T(1,128)}', space=vmem, size = 0x12000, scoped, tag = 'internal scratch']
  %s0 = inlined_call_operand.vmem [shape: f32[8,2,8], index: 0, kind: input, shape index: {}]
  %s1 = inlined_call_operand.vmem [shape: f32[8,384], index: 1, kind: input, shape index: {}]
  %s2 = inlined_call_operand.vmem [shape: f32[8,2,128], index: 2, kind: output, shape index: {0}]
  %s3 = inlined_call_operand.vmem [shape: f32[8,2,128], index: 3, kind: output, shape index: {1}]
  %4 = xla_tuple %s2, %s3
  %s5 = sld [smem:[#allocation0]]
  $region56: #{multihead_dilated_attention.3} parent=0
    _
  %s7 = ssub.s32 1, %s5
  %s8 = scalar_select 0, %s7, %s5
  loop: start=0, step=1, limit=4
  $region2: #{multihead_dilated_attention.3} parent=0 // loop_pre_header
    _
  $region3: #{multihead_dilated_attention.3} parent=0 // loop_header
    %s10 = sphi 0, %s14
    %p11 = scmp.ge.s32.totalorder %s10, 4
    %s20 = sphi 0, %s22
    %s23 = sphi 0, %s20
    %s24 = sphi 0, %s23
    %s40 = sphi 0, %s24
    %s44 = sphi 0, %s44
    %s46 = sphi 0, %s44
    %s47 = sphi 0, %s46
    %s61 = sphi 0, %s47
    %s67 = sphi 0, %s69
    %s70 = sphi 0, %s67
    %s71 = sphi 0, %s70
    %s87 = sphi 0, %s71
    %s93 = sphi 0, %s95
    %s96 = sphi 0, %s93
    %s97 = sphi 0, %s96
    %s113 = sphi 0, %s97
  $region4: #{multihead_dilated_attention.3} parent=0 // loop_header_branch
    %13 = sbr.rel (%p11) target = $region8
  $region5: #{multihead_dilated_attention.3} parent=0 // loop_body
    %s15 = ssub.s32 %s10, 1
    %s16 = ssub.s32 %s10, 2
    %s17 = sadd.s32 %s10, 1
    %s18 = ssub.s32 %s10, %s17
    %p19 = scmp.eq.s32.totalorder %s18, 0
    %s21 = sadd.s32 %s20, 1
    %s22 = scalar_select %p19, %s20, %s21
    %p25 = pneg %p19
    %p26 = scmp.eq.s32.totalorder %s10, 1
    %p27 = por %p25, %p26
    %p28 = scmp.ne.s32.totalorder %s20, %s23
    %p29 = scmp.eq.s32.totalorder %s10, 0
    %p30 = por %p28, %p29
    %p31 = scmp.ne.s32.totalorder %s20, %s23
    %p32 = scmp.eq.s32.totalorder %s15, 1
    %p33 = por %p31, %p32
    %p34 = scmp.ne.s32.totalorder %s23, %s24
    %p35 = scmp.eq.s32.totalorder %s15, 0
    %p36 = por %p34, %p35
    %p37 = scmp.ne.s32.totalorder %s23, %s24
    %p38 = scmp.eq.s32.totalorder %s16, 1
    %p39 = por %p37, %p38
    %p41 = scmp.ne.s32.totalorder %s24, %s40
    %p42 = scmp.eq.s32.totalorder %s16, 0
    %p43 = por %p41, %p42
    %s45 = sadd.s32 %s44, 1
    %p48 = scmp.eq.s32.totalorder %s10, 1
    %p49 = scmp.ne.s32.totalorder %s44, %s46
    %p50 = scmp.eq.s32.totalorder %s10, 0
    %p51 = por %p49, %p50
    %p52 = scmp.ne.s32.totalorder %s44, %s46
    %p53 = scmp.eq.s32.totalorder %s15, 1
    %p54 = por %p52, %p53
    %p55 = scmp.ne.s32.totalorder %s46, %s47
    %p56 = scmp.eq.s32.totalorder %s15, 0
    %p57 = por %p55, %p56
    %p58 = scmp.ne.s32.totalorder %s46, %s47
    %p59 = scmp.eq.s32.totalorder %s16, 1
    %p60 = por %p58, %p59
    %p62 = scmp.ne.s32.totalorder %s47, %s61
    %p63 = scmp.eq.s32.totalorder %s16, 0
    %p64 = por %p62, %p63
    %s65 = ssub.s32 %s10, %s17
    %p66 = scmp.eq.s32.totalorder %s65, 0
    %s68 = sadd.s32 %s67, 1
    %s69 = scalar_select %p66, %s67, %s68
    %p72 = pneg %p66
    %p73 = scmp.eq.s32.totalorder %s10, 1
    %p74 = por %p72, %p73
    %p75 = scmp.ne.s32.totalorder %s67, %s70
    %p76 = scmp.eq.s32.totalorder %s10, 0
    %p77 = por %p75, %p76
    %p78 = scmp.ne.s32.totalorder %s67, %s70
    %p79 = scmp.eq.s32.totalorder %s15, 1
    %p80 = por %p78, %p79
    %p81 = scmp.ne.s32.totalorder %s70, %s71
    %p82 = scmp.eq.s32.totalorder %s15, 0
    %p83 = por %p81, %p82
    %p84 = scmp.ne.s32.totalorder %s70, %s71
    %p85 = scmp.eq.s32.totalorder %s16, 1
    %p86 = por %p84, %p85
    %p88 = scmp.ne.s32.totalorder %s71, %s87
    %p89 = scmp.eq.s32.totalorder %s16, 0
    %p90 = por %p88, %p89
    %s91 = ssub.s32 %s10, %s17
    %p92 = scmp.eq.s32.totalorder %s91, 0
    %s94 = sadd.s32 %s93, 1
    %s95 = scalar_select %p92, %s93, %s94
    %p98 = pneg %p92
    %p99 = scmp.eq.s32.totalorder %s10, 1
    %p100 = por %p98, %p99
    %p101 = scmp.ne.s32.totalorder %s93, %s96
    %p102 = scmp.eq.s32.totalorder %s10, 0
    %p103 = por %p101, %p102
    %p104 = scmp.ne.s32.totalorder %s93, %s96
    %p105 = scmp.eq.s32.totalorder %s15, 1
    %p106 = por %p104, %p105
    %p107 = scmp.ne.s32.totalorder %s96, %s97
    %p108 = scmp.eq.s32.totalorder %s15, 0
    %p109 = por %p107, %p108
    %p110 = scmp.ne.s32.totalorder %s96, %s97
    %p111 = scmp.eq.s32.totalorder %s16, 1
    %p112 = por %p110, %p111
    %p114 = scmp.ne.s32.totalorder %s97, %s113
    %p115 = scmp.eq.s32.totalorder %s16, 0
    %p116 = por %p114, %p115
    %p117 = scmp.le.s32.totalorder 1, %s10
    %p118 = scmp.lt.s32.totalorder %s10, 3
    %p119 = pnand %p117, %p118
    %p120 = pneg %p119
    // Predicated region
    $region9: #{multihead_dilated_attention.3} parent=5 // pred_check
      _
    $region10: #{multihead_dilated_attention.3} parent=5 // pred_check_branch
      %122 = sbr.rel (%p119) target = $region12
    $region11: #{multihead_dilated_attention.3} parent=5 // pred_region
      %s123 = ssub.s32 %s10, 1
      // Predicated region
      $region13: #{multihead_dilated_attention.3} parent=11 // pred_check
        %p124 = pneg %p57
      $region14: #{multihead_dilated_attention.3} parent=11 // pred_check_branch
        %126 = sbr.rel (%p124) target = $region16
      $region15: #{multihead_dilated_attention.3} parent=11 // pred_region
        _
      $region16: #{multihead_dilated_attention.3} parent=11 // pred_fallthru
        _
    $region12: #{multihead_dilated_attention.3} parent=5 // pred_fallthru
      _
    %p127 = scmp.lt.s32.totalorder %s10, 2
    // Predicated region
    $region17: #{multihead_dilated_attention.3} parent=5 // pred_check
      %p128 = pneg %p127
    $region18: #{multihead_dilated_attention.3} parent=5 // pred_check_branch
      %130 = sbr.rel (%p128) target = $region20
    $region19: #{multihead_dilated_attention.3} parent=5 // pred_region
      // Predicated region
      $region21: #{multihead_dilated_attention.3} parent=19 // pred_check
        %p131 = pneg %p30
      $region22: #{multihead_dilated_attention.3} parent=19 // pred_check_branch
        %133 = sbr.rel (%p131) target = $region24
      $region23: #{multihead_dilated_attention.3} parent=19 // pred_region
        %s134 = smul.u32 4, %s10
        %p135 = scmp.lt.s32.totalorder %s134, 7
        %s136 = scalar_select %p135, %s134, 7
        %s137 = smul.addr %s136, 2
        %s138 = scalar_lea.vmem %s0, %s137
        %s139 = smul.u32 4, %s10
      $region24: #{multihead_dilated_attention.3} parent=19 // pred_fallthru
        _
    $region20: #{multihead_dilated_attention.3} parent=5 // pred_fallthru
      _
    %p140 = scmp.le.s32.totalorder 1, %s10
    %p141 = scmp.lt.s32.totalorder %s10, 3
    %p142 = pnand %p140, %p141
    %p143 = pneg %p142
    // Predicated region
    $region25: #{multihead_dilated_attention.3} parent=5 // pred_check
      _
    $region26: #{multihead_dilated_attention.3} parent=5 // pred_check_branch
      %145 = sbr.rel (%p142) target = $region28
    $region27: #{multihead_dilated_attention.3} parent=5 // pred_region
      %s146 = ssub.s32 %s10, 1
      %s147 = smul.u32 4, %s15
      %p148 = scmp.lt.s32.totalorder %s147, 7
      %s149 = scalar_select %p148, %s147, 7
      %s150 = smul.addr %s149, 2
      %s151 = scalar_lea.vmem %s0, %s150
      %p152 = pneg %p36
      %p153 = pneg %p33
      %p154 = pneg %p57
      %p155 = pneg %p54
      %p156 = pneg %p83
      %p157 = pneg %p80
      %s158 = smul.u32 4, %s15
      %p159 = scmp.lt.s32.totalorder %s158, 7
      %s160 = scalar_select %p159, %s158, 7
      %s161 = smul.addr %s160, 2
      %s162 = scalar_lea.vmem %s2, %s161
      %p163 = pneg %p109
      %p164 = pneg %p106
      %s165 = smul.u32 4, %s15
      %p166 = scmp.lt.s32.totalorder %s165, 7
      %s167 = scalar_select %p166, %s165, 7
      %s168 = smul.addr %s167, 2
      %s169 = scalar_lea.vmem %s3, %s168
      %s170 = smul.u32 4, %s15
      %p171 = scmp.lt.s32.totalorder %s170, 7
      %s172 = scalar_select %p171, %s170, 7
      %s173 = smul.addr %s172, 2
      %s174 = scalar_lea.vmem %s0, %s173
      %s175 = smul.u32 4, %s15
      %s176 = smul.u32 4, %s15
      %p177 = scmp.lt.s32.totalorder %s176, 7
      %s178 = scalar_select %p177, %s176, 7
      %s179 = smul.addr %s178, 2
      %s180 = scalar_lea.vmem %s2, %s179
      %s181 = smul.u32 4, %s15
      %s182 = smul.u32 4, %s15
      %p183 = scmp.lt.s32.totalorder %s182, 7
      %s184 = scalar_select %p183, %s182, 7
      %s185 = smul.addr %s184, 2
      %s186 = scalar_lea.vmem %s3, %s185
      %s187 = smul.u32 4, %s15
      %v188 = vld [vmem:[%s1] sm:$0xff]
      %v189 = vld [vmem:[%s1 + $0x8] sm:$0xff]
      %v190 = vld [vmem:[%s1 + $0x10] sm:$0xff]
      %v191 = vlaneseq
      %v192 = vshrl.u32 %v191, 7
      %v193 = vlaneseq
      %v194 = vand.u32 %v193, 127
      %vm195 = vcmp.le.s32.totalorder %v192, %v194
      loop: start=0, step=1, limit=4
      $region29: #{multihead_dilated_attention.3} parent=27 // loop_pre_header
        _
      $region30: #{multihead_dilated_attention.3} parent=27 // loop_header
        %s197 = sphi 0, %s201
        %p198 = scmp.ge.s32.totalorder %s197, 4
      $region31: #{multihead_dilated_attention.3} parent=27 // loop_header_branch
        %200 = sbr.rel (%p198) target = $region35
      $region32: #{multihead_dilated_attention.3} parent=27 // loop_body
        %s202 = smul.u32 %s197, 2
        %s203 = scalar_lea.vmem %s174, %s202
        %v204 = vld [vmem:[%s203] sm:$0x3]
        %vm205 = vcmask 64512
        %v207 = vsel %vm205, %v204, 0
        %209 = vmatprep.subr.mxu0 0.0
        %210 = vmatpush1.msra.mxu0 0.0
        %211 = vmatprep.subr.mxu0 0.0
        %212 = vmatpush1.msra.mxu0 0.0
        %213 = vmatprep.subr.mxu0 0.0
        %214 = vmatpush1.msra.mxu0 0.0
        %215 = vmatprep.subr.mxu0 0.0
        %216 = vmatpush1.msra.mxu0 0.0
        %217 = vmatprep.subr.mxu0 0.0
        %218 = vmatpush1.msra.mxu0 0.0
        %219 = vmatprep.subr.mxu0 0.0
        %220 = vmatpush1.msra.mxu0 0.0
        %221 = vmatprep.subr.mxu0 0.0
        %222 = vmatpush1.msra.mxu0 0.0
        %223 = vmatprep.subr.mxu0 0.0
        %224 = vmatpush1.msra.mxu0 0.0
        %225 = vmatprep.subr.mxu0 0.0
        %226 = vmatpush1.msra.mxu0 0.0
        %227 = vmatprep.subr.mxu0 0.0
        %228 = vmatpush1.msra.mxu0 0.0
        %229 = vmatprep.subr.mxu0 0.0
        %230 = vmatpush1.msra.mxu0 0.0
        %231 = vmatprep.subr.mxu0 0.0
        %232 = vmatpush1.msra.mxu0 0.0
        %233 = vmatprep.subr.mxu0 0.0
        %234 = vmatpush1.msra.mxu0 0.0
        %235 = vmatprep.subr.mxu0 0.0
        %236 = vmatpush1.msra.mxu0 0.0
        %237 = vmatprep.subr.mxu0 0.0
        %238 = vmatpush1.msra.mxu0 0.0
        %239 = vmatprep.subr.mxu0 %v189
        %240 = vmatpush1.msra.mxu0 %v188
        %241 = vmatprep.subr.mxu0 0.0
        %242 = vmatpush2.msra.mxu0 0.0
        %243 = vmatprep.subr.mxu0 0.0
        %244 = vmatpush2.msra.mxu0 0.0
        %245 = vmatprep.subr.mxu0 0.0
        %246 = vmatpush2.msra.mxu0 0.0
        %247 = vmatprep.subr.mxu0 0.0
        %248 = vmatpush2.msra.mxu0 0.0
        %249 = vmatprep.subr.mxu0 0.0
        %250 = vmatpush2.msra.mxu0 0.0
        %251 = vmatprep.subr.mxu0 0.0
        %252 = vmatpush2.msra.mxu0 0.0
        %253 = vmatprep.subr.mxu0 0.0
        %254 = vmatpush2.msra.mxu0 0.0
        %255 = vmatprep.subr.mxu0 0.0
        %256 = vmatpush2.msra.mxu0 0.0
        %257 = vmatprep.subr.mxu0 0.0
        %258 = vmatpush2.msra.mxu0 0.0
        %259 = vmatprep.subr.mxu0 0.0
        %260 = vmatpush2.msra.mxu0 0.0
        %261 = vmatprep.subr.mxu0 0.0
        %262 = vmatpush2.msra.mxu0 0.0
        %263 = vmatprep.subr.mxu0 0.0
        %264 = vmatpush2.msra.mxu0 0.0
        %265 = vmatprep.subr.mxu0 0.0
        %266 = vmatpush2.msra.mxu0 0.0
        %267 = vmatprep.subr.mxu0 0.0
        %268 = vmatpush2.msra.mxu0 0.0
        %269 = vmatprep.subr.mxu0 0.0
        %270 = vmatpush2.msra.mxu0 0.0
        %271 = vmatprep.subr.mxu0 0.0
        %272 = vmatpush2.msra.mxu0 0.0
        %273 = vmatprep.mubr.f32.mxu0 0.0
        %274 = vmatmul.mubr.f32.gmra.mxu0 %v207
        %v275 = vpop.f32.mrf.mxu0
        %v276 = vadd.f32 0.0, %v275
        %v277 = vpop.f32.mrf.mxu0
        %v278 = vadd.f32 0.0, %v277
        %279 = vdwg.mxu0
        %280 = vmatprep.subr.mxu0 0.0
        %281 = vmatpush1.msra.mxu0 0.0
        %282 = vmatprep.subr.mxu0 0.0
        %283 = vmatpush1.msra.mxu0 0.0
        %284 = vmatprep.subr.mxu0 0.0
        %285 = vmatpush1.msra.mxu0 0.0
        %286 = vmatprep.subr.mxu0 0.0
        %287 = vmatpush1.msra.mxu0 0.0
        %288 = vmatprep.subr.mxu0 0.0
        %289 = vmatpush1.msra.mxu0 0.0
        %290 = vmatprep.subr.mxu0 0.0
        %291 = vmatpush1.msra.mxu0 0.0
        %292 = vmatprep.subr.mxu0 0.0
        %293 = vmatpush1.msra.mxu0 0.0
        %294 = vmatprep.subr.mxu0 0.0
        %295 = vmatpush1.msra.mxu0 0.0
        %296 = vmatprep.subr.mxu0 0.0
        %297 = vmatpush1.msra.mxu0 0.0
        %298 = vmatprep.subr.mxu0 0.0
        %299 = vmatpush1.msra.mxu0 0.0
        %300 = vmatprep.subr.mxu0 0.0
        %301 = vmatpush1.msra.mxu0 0.0
        %302 = vmatprep.subr.mxu0 0.0
        %303 = vmatpush1.msra.mxu0 0.0
        %304 = vmatprep.subr.mxu0 0.0
        %305 = vmatpush1.msra.mxu0 0.0
        %306 = vmatprep.subr.mxu0 0.0
        %307 = vmatpush1.msra.mxu0 0.0
        %308 = vmatprep.subr.mxu0 0.0
        %309 = vmatpush1.msra.mxu0 0.0
        %310 = vmatprep.subr.mxu0 0.0
        %311 = vmatpush1.msra.mxu0 %v190
        %312 = vmatprep.subr.mxu0 0.0
        %313 = vmatpush2.msra.mxu0 0.0
        %314 = vmatprep.subr.mxu0 0.0
        %315 = vmatpush2.msra.mxu0 0.0
        %316 = vmatprep.subr.mxu0 0.0
        %317 = vmatpush2.msra.mxu0 0.0
        %318 = vmatprep.subr.mxu0 0.0
        %319 = vmatpush2.msra.mxu0 0.0
        %320 = vmatprep.subr.mxu0 0.0
        %321 = vmatpush2.msra.mxu0 0.0
        %322 = vmatprep.subr.mxu0 0.0
        %323 = vmatpush2.msra.mxu0 0.0
        %324 = vmatprep.subr.mxu0 0.0
        %325 = vmatpush2.msra.mxu0 0.0
        %326 = vmatprep.subr.mxu0 0.0
        %327 = vmatpush2.msra.mxu0 0.0
        %328 = vmatprep.subr.mxu0 0.0
        %329 = vmatpush2.msra.mxu0 0.0
        %330 = vmatprep.subr.mxu0 0.0
        %331 = vmatpush2.msra.mxu0 0.0
        %332 = vmatprep.subr.mxu0 0.0
        %333 = vmatpush2.msra.mxu0 0.0
        %334 = vmatprep.subr.mxu0 0.0
        %335 = vmatpush2.msra.mxu0 0.0
        %336 = vmatprep.subr.mxu0 0.0
        %337 = vmatpush2.msra.mxu0 0.0
        %338 = vmatprep.subr.mxu0 0.0
        %339 = vmatpush2.msra.mxu0 0.0
        %340 = vmatprep.subr.mxu0 0.0
        %341 = vmatpush2.msra.mxu0 0.0
        %342 = vmatprep.subr.mxu0 0.0
        %343 = vmatpush2.msra.mxu0 0.0
        %344 = vmatprep.mubr.f32.mxu0 0.0
        %345 = vmatmul.mubr.f32.gmra.mxu0 %v207
        %v346 = vpop.f32.mrf.mxu0
        %v347 = vadd.f32 0.0, %v346
        %v348 = vpop.f32.mrf.mxu0
        %349 = vdwg.mxu0
        %350 = vmatprep.subr.mxu0 0.0
        %351 = vmatpush1.xpose.msra.mxu0 0.0
        %352 = vmatprep.subr.mxu0 0.0
        %353 = vmatpush1.xpose.msra.mxu0 0.0
        %354 = vmatprep.subr.mxu0 0.0
        %355 = vmatpush1.xpose.msra.mxu0 0.0
        %356 = vmatprep.subr.mxu0 0.0
        %357 = vmatpush1.xpose.msra.mxu0 0.0
        %358 = vmatprep.subr.mxu0 0.0
        %359 = vmatpush1.xpose.msra.mxu0 0.0
        %360 = vmatprep.subr.mxu0 0.0
        %361 = vmatpush1.xpose.msra.mxu0 0.0
        %362 = vmatprep.subr.mxu0 0.0
        %363 = vmatpush1.xpose.msra.mxu0 0.0
        %364 = vmatprep.subr.mxu0 0.0
        %365 = vmatpush1.xpose.msra.mxu0 0.0
        %366 = vmatprep.subr.mxu0 0.0
        %367 = vmatpush1.xpose.msra.mxu0 0.0
        %368 = vmatprep.subr.mxu0 0.0
        %369 = vmatpush1.xpose.msra.mxu0 0.0
        %370 = vmatprep.subr.mxu0 0.0
        %371 = vmatpush1.xpose.msra.mxu0 0.0
        %372 = vmatprep.subr.mxu0 0.0
        %373 = vmatpush1.xpose.msra.mxu0 0.0
        %374 = vmatprep.subr.mxu0 0.0
        %375 = vmatpush1.xpose.msra.mxu0 0.0
        %376 = vmatprep.subr.mxu0 0.0
        %377 = vmatpush1.xpose.msra.mxu0 0.0
        %378 = vmatprep.subr.mxu0 0.0
        %379 = vmatpush1.xpose.msra.mxu0 0.0
        %380 = vmatprep.subr.mxu0 0.0
        %381 = vmatpush1.xpose.msra.mxu0 %v278
        %382 = vmatprep.subr.mxu0 0.0
        %383 = vmatpush2.xpose.msra.mxu0 0.0
        %384 = vmatprep.subr.mxu0 0.0
        %385 = vmatpush2.xpose.msra.mxu0 0.0
        %386 = vmatprep.subr.mxu0 0.0
        %387 = vmatpush2.xpose.msra.mxu0 0.0
        %388 = vmatprep.subr.mxu0 0.0
        %389 = vmatpush2.xpose.msra.mxu0 0.0
        %390 = vmatprep.subr.mxu0 0.0
        %391 = vmatpush2.xpose.msra.mxu0 0.0
        %392 = vmatprep.subr.mxu0 0.0
        %393 = vmatpush2.xpose.msra.mxu0 0.0
        %394 = vmatprep.subr.mxu0 0.0
        %395 = vmatpush2.xpose.msra.mxu0 0.0
        %396 = vmatprep.subr.mxu0 0.0
        %397 = vmatpush2.xpose.msra.mxu0 0.0
        %398 = vmatprep.subr.mxu0 0.0
        %399 = vmatpush2.xpose.msra.mxu0 0.0
        %400 = vmatprep.subr.mxu0 0.0
        %401 = vmatpush2.xpose.msra.mxu0 0.0
        %402 = vmatprep.subr.mxu0 0.0
        %403 = vmatpush2.xpose.msra.mxu0 0.0
        %404 = vmatprep.subr.mxu0 0.0
        %405 = vmatpush2.xpose.msra.mxu0 0.0
        %406 = vmatprep.subr.mxu0 0.0
        %407 = vmatpush2.xpose.msra.mxu0 0.0
        %408 = vmatprep.subr.mxu0 0.0
        %409 = vmatpush2.xpose.msra.mxu0 0.0
        %410 = vmatprep.subr.mxu0 0.0
        %411 = vmatpush2.xpose.msra.mxu0 0.0
        %412 = vmatprep.subr.mxu0 0.0
        %413 = vmatpush2.xpose.msra.mxu0 0.0
        %414 = vmatprep.mubr.f32.mxu0 0.0
        %415 = vmatmul.mubr.f32.gmra.mxu0 %v276
        %v416 = vpop.f32.mrf.mxu0
        %v417 = vadd.f32 0.0, %v416
        %v418 = vpop.f32.mrf.mxu0
        %419 = vdwg.mxu0
        %v420 = vsel %vm195, %v417, -1e+30
        %vm421 = vcmask 9216
        %v422 = vsel %vm421, %v420, -inf
        %v423 = vrot.slane %v422, 4
        %v424 = vmax.f32 %v422, %v423
        %v425 = vrot.slane %v424, 2
        %v426 = vmax.f32 %v424, %v425
        %v427 = vrot.slane %v426, 1
        %v428 = vmax.f32 %v426, %v427
        %v429 = vsub.f32 %v420, %v428
        %v430 = vmul.f32 %v429, 1.442695
        %v431 = vpow.pop %v430
        %v432 = vsel %vm421, %v431, 0.0
        %v433 = vrot.slane %v432, 4
        %v434 = vadd.f32 %v432, %v433
        %v435 = vrot.slane %v434, 2
        %v436 = vadd.f32 %v434, %v435
        %v437 = vrot.slane %v436, 1
        %v438 = vadd.f32 %v436, %v437
        %439 = vxpose.xlu0.b32.start [1/16] %v438, 128
        %440 = vxpose.xlu0.b32.cont [2/16] 0.0, 128
        %441 = vxpose.xlu0.b32.cont [3/16] 0.0, 128
        %442 = vxpose.xlu0.b32.cont [4/16] 0.0, 128
        %443 = vxpose.xlu0.b32.cont [5/16] 0.0, 128
        %444 = vxpose.xlu0.b32.cont [6/16] 0.0, 128
        %445 = vxpose.xlu0.b32.cont [7/16] 0.0, 128
        %446 = vxpose.xlu0.b32.cont [8/16] 0.0, 128
        %447 = vxpose.xlu0.b32.cont [9/16] 0.0, 128
        %448 = vxpose.xlu0.b32.cont [10/16] 0.0, 128
        %449 = vxpose.xlu0.b32.cont [11/16] 0.0, 128
        %450 = vxpose.xlu0.b32.cont [12/16] 0.0, 128
        %451 = vxpose.xlu0.b32.cont [13/16] 0.0, 128
        %452 = vxpose.xlu0.b32.cont [14/16] 0.0, 128
        %453 = vxpose.xlu0.b32.cont [15/16] 0.0, 128
        %454 = vxpose.xlu0.b32.end [16/16] 0.0, 128
        %v455 = vpop.trf.xlu0
        %v456 = vpop.trf.xlu0
        %v457 = vpop.trf.xlu0
        %v458 = vpop.trf.xlu0
        %v459 = vpop.trf.xlu0
        %v460 = vpop.trf.xlu0
        %v461 = vpop.trf.xlu0
        %v462 = vpop.trf.xlu0
        %v463 = vpop.trf.xlu0
        %v464 = vpop.trf.xlu0
        %v465 = vpop.trf.xlu0
        %v466 = vpop.trf.xlu0
        %v467 = vpop.trf.xlu0
        %v468 = vpop.trf.xlu0
        %v469 = vpop.trf.xlu0
        %v470 = vpop.trf.xlu0
        %v471 = vrcp.pop %v455
        %v472 = vmul.f32 1.0, %v471
        %474 = vset.pattern.permute.xlu0 0
        %475 = vperm.xlu0 %474, %v472
        %v476 = vpop.permute.xlu0 %475
        %v478 = vmul.f32 %v347, %v476
        %vm479 = vcmask 15360
        %v481 = vsel %vm479, %v431, 0
        %vm483 = vcmask 1041408
        %v485 = vsel %vm483, %v478, 0
        %487 = vmatprep.subr.mxu0 0.0
        %488 = vmatpush1.msra.mxu0 0.0
        %489 = vmatprep.subr.mxu0 0.0
        %490 = vmatpush1.msra.mxu0 0.0
        %491 = vmatprep.subr.mxu0 0.0
        %492 = vmatpush1.msra.mxu0 0.0
        %493 = vmatprep.subr.mxu0 0.0
        %494 = vmatpush1.msra.mxu0 0.0
        %495 = vmatprep.subr.mxu0 0.0
        %496 = vmatpush1.msra.mxu0 0.0
        %497 = vmatprep.subr.mxu0 0.0
        %498 = vmatpush1.msra.mxu0 0.0
        %499 = vmatprep.subr.mxu0 0.0
        %500 = vmatpush1.msra.mxu0 0.0
        %501 = vmatprep.subr.mxu0 0.0
        %502 = vmatpush1.msra.mxu0 0.0
        %503 = vmatprep.subr.mxu0 0.0
        %504 = vmatpush1.msra.mxu0 0.0
        %505 = vmatprep.subr.mxu0 0.0
        %506 = vmatpush1.msra.mxu0 0.0
        %507 = vmatprep.subr.mxu0 0.0
        %508 = vmatpush1.msra.mxu0 0.0
        %509 = vmatprep.subr.mxu0 0.0
        %510 = vmatpush1.msra.mxu0 0.0
        %511 = vmatprep.subr.mxu0 0.0
        %512 = vmatpush1.msra.mxu0 0.0
        %513 = vmatprep.subr.mxu0 0.0
        %514 = vmatpush1.msra.mxu0 0.0
        %515 = vmatprep.subr.mxu0 0.0
        %516 = vmatpush1.msra.mxu0 0.0
        %517 = vmatprep.subr.mxu0 0.0
        %518 = vmatpush1.msra.mxu0 %v485
        %519 = vmatprep.subr.mxu0 0.0
        %520 = vmatpush2.msra.mxu0 0.0
        %521 = vmatprep.subr.mxu0 0.0
        %522 = vmatpush2.msra.mxu0 0.0
        %523 = vmatprep.subr.mxu0 0.0
        %524 = vmatpush2.msra.mxu0 0.0
        %525 = vmatprep.subr.mxu0 0.0
        %526 = vmatpush2.msra.mxu0 0.0
        %527 = vmatprep.subr.mxu0 0.0
        %528 = vmatpush2.msra.mxu0 0.0
        %529 = vmatprep.subr.mxu0 0.0
        %530 = vmatpush2.msra.mxu0 0.0
        %531 = vmatprep.subr.mxu0 0.0
        %532 = vmatpush2.msra.mxu0 0.0
        %533 = vmatprep.subr.mxu0 0.0
        %534 = vmatpush2.msra.mxu0 0.0
        %535 = vmatprep.subr.mxu0 0.0
        %536 = vmatpush2.msra.mxu0 0.0
        %537 = vmatprep.subr.mxu0 0.0
        %538 = vmatpush2.msra.mxu0 0.0
        %539 = vmatprep.subr.mxu0 0.0
        %540 = vmatpush2.msra.mxu0 0.0
        %541 = vmatprep.subr.mxu0 0.0
        %542 = vmatpush2.msra.mxu0 0.0
        %543 = vmatprep.subr.mxu0 0.0
        %544 = vmatpush2.msra.mxu0 0.0
        %545 = vmatprep.subr.mxu0 0.0
        %546 = vmatpush2.msra.mxu0 0.0
        %547 = vmatprep.subr.mxu0 0.0
        %548 = vmatpush2.msra.mxu0 0.0
        %549 = vmatprep.subr.mxu0 0.0
        %550 = vmatpush2.msra.mxu0 0.0
        %551 = vmatprep.mubr.f32.mxu0 0.0
        %552 = vmatmul.mubr.f32.gmra.mxu0 %v481
        %v553 = vpop.f32.mrf.mxu0
        %v554 = vadd.f32 0.0, %v553
        %v555 = vpop.f32.mrf.mxu0
        %556 = vdwg.mxu0
        %558 = vset.pattern.permute.xlu0 0
        %559 = vperm.xlu0 %558, %v455
        %v560 = vpop.permute.xlu0 %559
        %v562 = vmul.f32 %v554, %v560
        %s563 = scalar_lea.vmem %s180, %s202
        %564 = vst [vmem:[%s563] sm:$0x3] %v562
        %s565 = scalar_lea.vmem %s186, %s202
        %566 = vst [vmem:[%s565] sm:$0x3] %v560
      $region33: #{multihead_dilated_attention.3} parent=27 // loop_footer
        %s201 = sadd.s32 1, %s197
      $region34: #{multihead_dilated_attention.3} parent=27 // loop_footer_branch
        %196 = sbr.rel target = $region30
      $region35: #{multihead_dilated_attention.3} parent=27 // loop_exit
        _
      %s567 = smul.u32 4, %s15
      %p568 = scmp.lt.s32.totalorder %s567, 7
      %s569 = scalar_select %p568, %s567, 7
      %s570 = smul.addr %s569, 2
      %s571 = scalar_lea.vmem %s2, %s570
      %s572 = smul.u32 4, %s15
      %p573 = scmp.lt.s32.totalorder %s572, 7
      %s574 = scalar_select %p573, %s572, 7
      %s575 = smul.addr %s574, 2
      %s576 = scalar_lea.vmem %s3, %s575
      // Predicated region
      $region36: #{multihead_dilated_attention.3} parent=27 // pred_check
        %p577 = pneg %p80
      $region37: #{multihead_dilated_attention.3} parent=27 // pred_check_branch
        %579 = sbr.rel (%p577) target = $region39
      $region38: #{multihead_dilated_attention.3} parent=27 // pred_region
        %s580 = smul.u32 4, %s15
      $region39: #{multihead_dilated_attention.3} parent=27 // pred_fallthru
        _
      // Predicated region
      $region40: #{multihead_dilated_attention.3} parent=27 // pred_check
        %p581 = pneg %p106
      $region41: #{multihead_dilated_attention.3} parent=27 // pred_check_branch
        %583 = sbr.rel (%p581) target = $region43
      $region42: #{multihead_dilated_attention.3} parent=27 // pred_region
        %s584 = smul.u32 4, %s15
      $region43: #{multihead_dilated_attention.3} parent=27 // pred_fallthru
        _
    $region28: #{multihead_dilated_attention.3} parent=5 // pred_fallthru
      _
    %p585 = scmp.le.s32.totalorder 2, %s10
    // Predicated region
    $region44: #{multihead_dilated_attention.3} parent=5 // pred_check
      %p586 = pneg %p585
    $region45: #{multihead_dilated_attention.3} parent=5 // pred_check_branch
      %588 = sbr.rel (%p586) target = $region47
    $region46: #{multihead_dilated_attention.3} parent=5 // pred_region
      %s589 = ssub.s32 %s10, 2
      // Predicated region
      $region48: #{multihead_dilated_attention.3} parent=46 // pred_check
        %p590 = pneg %p86
      $region49: #{multihead_dilated_attention.3} parent=46 // pred_check_branch
        %592 = sbr.rel (%p590) target = $region51
      $region50: #{multihead_dilated_attention.3} parent=46 // pred_region
        %s593 = smul.u32 4, %s16
        %p594 = scmp.lt.s32.totalorder %s593, 7
        %s595 = scalar_select %p594, %s593, 7
        %s596 = smul.addr %s595, 2
        %s597 = scalar_lea.vmem %s2, %s596
      $region51: #{multihead_dilated_attention.3} parent=46 // pred_fallthru
        _
      // Predicated region
      $region52: #{multihead_dilated_attention.3} parent=46 // pred_check
        %p598 = pneg %p112
      $region53: #{multihead_dilated_attention.3} parent=46 // pred_check_branch
        %600 = sbr.rel (%p598) target = $region55
      $region54: #{multihead_dilated_attention.3} parent=46 // pred_region
        %s601 = smul.u32 4, %s16
        %p602 = scmp.lt.s32.totalorder %s601, 7
        %s603 = scalar_select %p602, %s601, 7
        %s604 = smul.addr %s603, 2
        %s605 = scalar_lea.vmem %s3, %s604
      $region55: #{multihead_dilated_attention.3} parent=46 // pred_fallthru
        _
    $region47: #{multihead_dilated_attention.3} parent=5 // pred_fallthru
      _
  $region6: #{multihead_dilated_attention.3} parent=0 // loop_footer
    %s14 = sadd.s32 1, %s10
  $region7: #{multihead_dilated_attention.3} parent=0 // loop_footer_branch
    %9 = sbr.rel target = $region3
  $region8: #{multihead_dilated_attention.3} parent=0 // loop_exit
    _

// kernel: multihead_dilated_attention.2
$region0: #{multihead_dilated_attention.2}
  #allocation0 [shape = 'u32[]', space=smem, size = 0x4, offset = 0x4, fixed_abs, tag = 'smem constant byte address 0x4 - core index']
  #allocation1 [shape = 'u32[144,128]{1,0:T(1,128)}', space=vmem, size = 0x12000, scoped, tag = 'internal scratch']
  %s0 = inlined_call_operand.vmem [shape: f32[4,8,8], index: 0, kind: input, shape index: {}]
  %s1 = inlined_call_operand.vmem [shape: f32[8,384], index: 1, kind: input, shape index: {}]
  %s2 = inlined_call_operand.vmem [shape: f32[4,8,128], index: 2, kind: output, shape index: {0}]
  %s3 = inlined_call_operand.vmem [shape: f32[4,8,128], index: 3, kind: output, shape index: {1}]
  %4 = xla_tuple %s2, %s3
  %s5 = sld [smem:[#allocation0]]
  $region56: #{multihead_dilated_attention.2} parent=0
    _
  %s7 = ssub.s32 1, %s5
  %s8 = scalar_select 0, %s7, %s5
  loop: start=0, step=1, limit=4
  $region2: #{multihead_dilated_attention.2} parent=0 // loop_pre_header
    _
  $region3: #{multihead_dilated_attention.2} parent=0 // loop_header
    %s10 = sphi 0, %s14
    %p11 = scmp.ge.s32.totalorder %s10, 4
    %s20 = sphi 0, %s22
    %s23 = sphi 0, %s20
    %s24 = sphi 0, %s23
    %s40 = sphi 0, %s24
    %s44 = sphi 0, %s44
    %s46 = sphi 0, %s44
    %s47 = sphi 0, %s46
    %s61 = sphi 0, %s47
    %s67 = sphi 0, %s69
    %s70 = sphi 0, %s67
    %s71 = sphi 0, %s70
    %s87 = sphi 0, %s71
    %s93 = sphi 0, %s95
    %s96 = sphi 0, %s93
    %s97 = sphi 0, %s96
    %s113 = sphi 0, %s97
  $region4: #{multihead_dilated_attention.2} parent=0 // loop_header_branch
    %13 = sbr.rel (%p11) target = $region8
  $region5: #{multihead_dilated_attention.2} parent=0 // loop_body
    %s15 = ssub.s32 %s10, 1
    %s16 = ssub.s32 %s10, 2
    %s17 = sadd.s32 %s10, 1
    %s18 = ssub.s32 %s10, %s17
    %p19 = scmp.eq.s32.totalorder %s18, 0
    %s21 = sadd.s32 %s20, 1
    %s22 = scalar_select %p19, %s20, %s21
    %p25 = pneg %p19
    %p26 = scmp.eq.s32.totalorder %s10, 1
    %p27 = por %p25, %p26
    %p28 = scmp.ne.s32.totalorder %s20, %s23
    %p29 = scmp.eq.s32.totalorder %s10, 0
    %p30 = por %p28, %p29
    %p31 = scmp.ne.s32.totalorder %s20, %s23
    %p32 = scmp.eq.s32.totalorder %s15, 1
    %p33 = por %p31, %p32
    %p34 = scmp.ne.s32.totalorder %s23, %s24
    %p35 = scmp.eq.s32.totalorder %s15, 0
    %p36 = por %p34, %p35
    %p37 = scmp.ne.s32.totalorder %s23, %s24
    %p38 = scmp.eq.s32.totalorder %s16, 1
    %p39 = por %p37, %p38
    %p41 = scmp.ne.s32.totalorder %s24, %s40
    %p42 = scmp.eq.s32.totalorder %s16, 0
    %p43 = por %p41, %p42
    %s45 = sadd.s32 %s44, 1
    %p48 = scmp.eq.s32.totalorder %s10, 1
    %p49 = scmp.ne.s32.totalorder %s44, %s46
    %p50 = scmp.eq.s32.totalorder %s10, 0
    %p51 = por %p49, %p50
    %p52 = scmp.ne.s32.totalorder %s44, %s46
    %p53 = scmp.eq.s32.totalorder %s15, 1
    %p54 = por %p52, %p53
    %p55 = scmp.ne.s32.totalorder %s46, %s47
    %p56 = scmp.eq.s32.totalorder %s15, 0
    %p57 = por %p55, %p56
    %p58 = scmp.ne.s32.totalorder %s46, %s47
    %p59 = scmp.eq.s32.totalorder %s16, 1
    %p60 = por %p58, %p59
    %p62 = scmp.ne.s32.totalorder %s47, %s61
    %p63 = scmp.eq.s32.totalorder %s16, 0
    %p64 = por %p62, %p63
    %s65 = ssub.s32 %s10, %s17
    %p66 = scmp.eq.s32.totalorder %s65, 0
    %s68 = sadd.s32 %s67, 1
    %s69 = scalar_select %p66, %s67, %s68
    %p72 = pneg %p66
    %p73 = scmp.eq.s32.totalorder %s10, 1
    %p74 = por %p72, %p73
    %p75 = scmp.ne.s32.totalorder %s67, %s70
    %p76 = scmp.eq.s32.totalorder %s10, 0
    %p77 = por %p75, %p76
    %p78 = scmp.ne.s32.totalorder %s67, %s70
    %p79 = scmp.eq.s32.totalorder %s15, 1
    %p80 = por %p78, %p79
    %p81 = scmp.ne.s32.totalorder %s70, %s71
    %p82 = scmp.eq.s32.totalorder %s15, 0
    %p83 = por %p81, %p82
    %p84 = scmp.ne.s32.totalorder %s70, %s71
    %p85 = scmp.eq.s32.totalorder %s16, 1
    %p86 = por %p84, %p85
    %p88 = scmp.ne.s32.totalorder %s71, %s87
    %p89 = scmp.eq.s32.totalorder %s16, 0
    %p90 = por %p88, %p89
    %s91 = ssub.s32 %s10, %s17
    %p92 = scmp.eq.s32.totalorder %s91, 0
    %s94 = sadd.s32 %s93, 1
    %s95 = scalar_select %p92, %s93, %s94
    %p98 = pneg %p92
    %p99 = scmp.eq.s32.totalorder %s10, 1
    %p100 = por %p98, %p99
    %p101 = scmp.ne.s32.totalorder %s93, %s96
    %p102 = scmp.eq.s32.totalorder %s10, 0
    %p103 = por %p101, %p102
    %p104 = scmp.ne.s32.totalorder %s93, %s96
    %p105 = scmp.eq.s32.totalorder %s15, 1
    %p106 = por %p104, %p105
    %p107 = scmp.ne.s32.totalorder %s96, %s97
    %p108 = scmp.eq.s32.totalorder %s15, 0
    %p109 = por %p107, %p108
    %p110 = scmp.ne.s32.totalorder %s96, %s97
    %p111 = scmp.eq.s32.totalorder %s16, 1
    %p112 = por %p110, %p111
    %p114 = scmp.ne.s32.totalorder %s97, %s113
    %p115 = scmp.eq.s32.totalorder %s16, 0
    %p116 = por %p114, %p115
    %p117 = scmp.le.s32.totalorder 1, %s10
    %p118 = scmp.lt.s32.totalorder %s10, 3
    %p119 = pnand %p117, %p118
    %p120 = pneg %p119
    // Predicated region
    $region9: #{multihead_dilated_attention.2} parent=5 // pred_check
      _
    $region10: #{multihead_dilated_attention.2} parent=5 // pred_check_branch
      %122 = sbr.rel (%p119) target = $region12
    $region11: #{multihead_dilated_attention.2} parent=5 // pred_region
      %s123 = ssub.s32 %s10, 1
      // Predicated region
      $region13: #{multihead_dilated_attention.2} parent=11 // pred_check
        %p124 = pneg %p57
      $region14: #{multihead_dilated_attention.2} parent=11 // pred_check_branch
        %126 = sbr.rel (%p124) target = $region16
      $region15: #{multihead_dilated_attention.2} parent=11 // pred_region
        _
      $region16: #{multihead_dilated_attention.2} parent=11 // pred_fallthru
        _
    $region12: #{multihead_dilated_attention.2} parent=5 // pred_fallthru
      _
    %p127 = scmp.lt.s32.totalorder %s10, 2
    // Predicated region
    $region17: #{multihead_dilated_attention.2} parent=5 // pred_check
      %p128 = pneg %p127
    $region18: #{multihead_dilated_attention.2} parent=5 // pred_check_branch
      %130 = sbr.rel (%p128) target = $region20
    $region19: #{multihead_dilated_attention.2} parent=5 // pred_region
      // Predicated region
      $region21: #{multihead_dilated_attention.2} parent=19 // pred_check
        %p131 = pneg %p30
      $region22: #{multihead_dilated_attention.2} parent=19 // pred_check_branch
        %133 = sbr.rel (%p131) target = $region24
      $region23: #{multihead_dilated_attention.2} parent=19 // pred_region
        %s134 = smul.u32 2, %s10
        %p135 = scmp.lt.s32.totalorder %s134, 3
        %s136 = scalar_select %p135, %s134, 3
        %s137 = smul.addr %s136, 8
        %s138 = scalar_lea.vmem %s0, %s137
        %s139 = smul.u32 2, %s10
      $region24: #{multihead_dilated_attention.2} parent=19 // pred_fallthru
        _
    $region20: #{multihead_dilated_attention.2} parent=5 // pred_fallthru
      _
    %p140 = scmp.le.s32.totalorder 1, %s10
    %p141 = scmp.lt.s32.totalorder %s10, 3
    %p142 = pnand %p140, %p141
    %p143 = pneg %p142
    // Predicated region
    $region25: #{multihead_dilated_attention.2} parent=5 // pred_check
      _
    $region26: #{multihead_dilated_attention.2} parent=5 // pred_check_branch
      %145 = sbr.rel (%p142) target = $region28
    $region27: #{multihead_dilated_attention.2} parent=5 // pred_region
      %s146 = ssub.s32 %s10, 1
      %s147 = smul.u32 2, %s15
      %p148 = scmp.lt.s32.totalorder %s147, 3
      %s149 = scalar_select %p148, %s147, 3
      %s150 = smul.addr %s149, 8
      %s151 = scalar_lea.vmem %s0, %s150
      %p152 = pneg %p36
      %p153 = pneg %p33
      %p154 = pneg %p57
      %p155 = pneg %p54
      %p156 = pneg %p83
      %p157 = pneg %p80
      %s158 = smul.u32 2, %s15
      %p159 = scmp.lt.s32.totalorder %s158, 3
      %s160 = scalar_select %p159, %s158, 3
      %s161 = smul.addr %s160, 8
      %s162 = scalar_lea.vmem %s2, %s161
      %p163 = pneg %p109
      %p164 = pneg %p106
      %s165 = smul.u32 2, %s15
      %p166 = scmp.lt.s32.totalorder %s165, 3
      %s167 = scalar_select %p166, %s165, 3
      %s168 = smul.addr %s167, 8
      %s169 = scalar_lea.vmem %s3, %s168
      %s170 = smul.u32 2, %s15
      %p171 = scmp.lt.s32.totalorder %s170, 3
      %s172 = scalar_select %p171, %s170, 3
      %s173 = smul.addr %s172, 8
      %s174 = scalar_lea.vmem %s0, %s173
      %s175 = smul.u32 2, %s15
      %s176 = smul.u32 2, %s15
      %p177 = scmp.lt.s32.totalorder %s176, 3
      %s178 = scalar_select %p177, %s176, 3
      %s179 = smul.addr %s178, 8
      %s180 = scalar_lea.vmem %s2, %s179
      %s181 = smul.u32 2, %s15
      %s182 = smul.u32 2, %s15
      %p183 = scmp.lt.s32.totalorder %s182, 3
      %s184 = scalar_select %p183, %s182, 3
      %s185 = smul.addr %s184, 8
      %s186 = scalar_lea.vmem %s3, %s185
      %s187 = smul.u32 2, %s15
      %v188 = vld [vmem:[%s1] sm:$0xff]
      %v189 = vld [vmem:[%s1 + $0x8] sm:$0xff]
      %v190 = vld [vmem:[%s1 + $0x10] sm:$0xff]
      %v191 = vlaneseq
      %v192 = vshrl.u32 %v191, 7
      %v193 = vlaneseq
      %v194 = vand.u32 %v193, 127
      %vm195 = vcmp.le.s32.totalorder %v192, %v194
      loop: start=0, step=1, limit=2
      $region29: #{multihead_dilated_attention.2} parent=27 // loop_pre_header
        _
      $region30: #{multihead_dilated_attention.2} parent=27 // loop_header
        %s197 = sphi 0, %s201
        %p198 = scmp.ge.s32.totalorder %s197, 2
      $region31: #{multihead_dilated_attention.2} parent=27 // loop_header_branch
        %200 = sbr.rel (%p198) target = $region35
      $region32: #{multihead_dilated_attention.2} parent=27 // loop_body
        %s202 = smul.u32 %s197, 8
        %s203 = scalar_lea.vmem %s174, %s202
        %v204 = vld [vmem:[%s203] sm:$0xff]
        %vm205 = vcmask 64512
        %v207 = vsel %vm205, %v204, 0
        %209 = vmatprep.subr.mxu0 0.0
        %210 = vmatpush1.msra.mxu0 0.0
        %211 = vmatprep.subr.mxu0 0.0
        %212 = vmatpush1.msra.mxu0 0.0
        %213 = vmatprep.subr.mxu0 0.0
        %214 = vmatpush1.msra.mxu0 0.0
        %215 = vmatprep.subr.mxu0 0.0
        %216 = vmatpush1.msra.mxu0 0.0
        %217 = vmatprep.subr.mxu0 0.0
        %218 = vmatpush1.msra.mxu0 0.0
        %219 = vmatprep.subr.mxu0 0.0
        %220 = vmatpush1.msra.mxu0 0.0
        %221 = vmatprep.subr.mxu0 0.0
        %222 = vmatpush1.msra.mxu0 0.0
        %223 = vmatprep.subr.mxu0 0.0
        %224 = vmatpush1.msra.mxu0 0.0
        %225 = vmatprep.subr.mxu0 0.0
        %226 = vmatpush1.msra.mxu0 0.0
        %227 = vmatprep.subr.mxu0 0.0
        %228 = vmatpush1.msra.mxu0 0.0
        %229 = vmatprep.subr.mxu0 0.0
        %230 = vmatpush1.msra.mxu0 0.0
        %231 = vmatprep.subr.mxu0 0.0
        %232 = vmatpush1.msra.mxu0 0.0
        %233 = vmatprep.subr.mxu0 0.0
        %234 = vmatpush1.msra.mxu0 0.0
        %235 = vmatprep.subr.mxu0 0.0
        %236 = vmatpush1.msra.mxu0 0.0
        %237 = vmatprep.subr.mxu0 0.0
        %238 = vmatpush1.msra.mxu0 0.0
        %239 = vmatprep.subr.mxu0 %v189
        %240 = vmatpush1.msra.mxu0 %v188
        %241 = vmatprep.subr.mxu0 0.0
        %242 = vmatpush2.msra.mxu0 0.0
        %243 = vmatprep.subr.mxu0 0.0
        %244 = vmatpush2.msra.mxu0 0.0
        %245 = vmatprep.subr.mxu0 0.0
        %246 = vmatpush2.msra.mxu0 0.0
        %247 = vmatprep.subr.mxu0 0.0
        %248 = vmatpush2.msra.mxu0 0.0
        %249 = vmatprep.subr.mxu0 0.0
        %250 = vmatpush2.msra.mxu0 0.0
        %251 = vmatprep.subr.mxu0 0.0
        %252 = vmatpush2.msra.mxu0 0.0
        %253 = vmatprep.subr.mxu0 0.0
        %254 = vmatpush2.msra.mxu0 0.0
        %255 = vmatprep.subr.mxu0 0.0
        %256 = vmatpush2.msra.mxu0 0.0
        %257 = vmatprep.subr.mxu0 0.0
        %258 = vmatpush2.msra.mxu0 0.0
        %259 = vmatprep.subr.mxu0 0.0
        %260 = vmatpush2.msra.mxu0 0.0
        %261 = vmatprep.subr.mxu0 0.0
        %262 = vmatpush2.msra.mxu0 0.0
        %263 = vmatprep.subr.mxu0 0.0
        %264 = vmatpush2.msra.mxu0 0.0
        %265 = vmatprep.subr.mxu0 0.0
        %266 = vmatpush2.msra.mxu0 0.0
        %267 = vmatprep.subr.mxu0 0.0
        %268 = vmatpush2.msra.mxu0 0.0
        %269 = vmatprep.subr.mxu0 0.0
        %270 = vmatpush2.msra.mxu0 0.0
        %271 = vmatprep.subr.mxu0 0.0
        %272 = vmatpush2.msra.mxu0 0.0
        %273 = vmatprep.mubr.f32.mxu0 0.0
        %274 = vmatmul.mubr.f32.gmra.mxu0 %v207
        %v275 = vpop.f32.mrf.mxu0
        %v276 = vadd.f32 0.0, %v275
        %v277 = vpop.f32.mrf.mxu0
        %v278 = vadd.f32 0.0, %v277
        %279 = vdwg.mxu0
        %280 = vmatprep.subr.mxu0 0.0
        %281 = vmatpush1.msra.mxu0 0.0
        %282 = vmatprep.subr.mxu0 0.0
        %283 = vmatpush1.msra.mxu0 0.0
        %284 = vmatprep.subr.mxu0 0.0
        %285 = vmatpush1.msra.mxu0 0.0
        %286 = vmatprep.subr.mxu0 0.0
        %287 = vmatpush1.msra.mxu0 0.0
        %288 = vmatprep.subr.mxu0 0.0
        %289 = vmatpush1.msra.mxu0 0.0
        %290 = vmatprep.subr.mxu0 0.0
        %291 = vmatpush1.msra.mxu0 0.0
        %292 = vmatprep.subr.mxu0 0.0
        %293 = vmatpush1.msra.mxu0 0.0
        %294 = vmatprep.subr.mxu0 0.0
        %295 = vmatpush1.msra.mxu0 0.0
        %296 = vmatprep.subr.mxu0 0.0
        %297 = vmatpush1.msra.mxu0 0.0
        %298 = vmatprep.subr.mxu0 0.0
        %299 = vmatpush1.msra.mxu0 0.0
        %300 = vmatprep.subr.mxu0 0.0
        %301 = vmatpush1.msra.mxu0 0.0
        %302 = vmatprep.subr.mxu0 0.0
        %303 = vmatpush1.msra.mxu0 0.0
        %304 = vmatprep.subr.mxu0 0.0
        %305 = vmatpush1.msra.mxu0 0.0
        %306 = vmatprep.subr.mxu0 0.0
        %307 = vmatpush1.msra.mxu0 0.0
        %308 = vmatprep.subr.mxu0 0.0
        %309 = vmatpush1.msra.mxu0 0.0
        %310 = vmatprep.subr.mxu0 0.0
        %311 = vmatpush1.msra.mxu0 %v190
        %312 = vmatprep.subr.mxu0 0.0
        %313 = vmatpush2.msra.mxu0 0.0
        %314 = vmatprep.subr.mxu0 0.0
        %315 = vmatpush2.msra.mxu0 0.0
        %316 = vmatprep.subr.mxu0 0.0
        %317 = vmatpush2.msra.mxu0 0.0
        %318 = vmatprep.subr.mxu0 0.0
        %319 = vmatpush2.msra.mxu0 0.0
        %320 = vmatprep.subr.mxu0 0.0
        %321 = vmatpush2.msra.mxu0 0.0
        %322 = vmatprep.subr.mxu0 0.0
        %323 = vmatpush2.msra.mxu0 0.0
        %324 = vmatprep.subr.mxu0 0.0
        %325 = vmatpush2.msra.mxu0 0.0
        %326 = vmatprep.subr.mxu0 0.0
        %327 = vmatpush2.msra.mxu0 0.0
        %328 = vmatprep.subr.mxu0 0.0
        %329 = vmatpush2.msra.mxu0 0.0
        %330 = vmatprep.subr.mxu0 0.0
        %331 = vmatpush2.msra.mxu0 0.0
        %332 = vmatprep.subr.mxu0 0.0
        %333 = vmatpush2.msra.mxu0 0.0
        %334 = vmatprep.subr.mxu0 0.0
        %335 = vmatpush2.msra.mxu0 0.0
        %336 = vmatprep.subr.mxu0 0.0
        %337 = vmatpush2.msra.mxu0 0.0
        %338 = vmatprep.subr.mxu0 0.0
        %339 = vmatpush2.msra.mxu0 0.0
        %340 = vmatprep.subr.mxu0 0.0
        %341 = vmatpush2.msra.mxu0 0.0
        %342 = vmatprep.subr.mxu0 0.0
        %343 = vmatpush2.msra.mxu0 0.0
        %344 = vmatprep.mubr.f32.mxu0 0.0
        %345 = vmatmul.mubr.f32.gmra.mxu0 %v207
        %v346 = vpop.f32.mrf.mxu0
        %v347 = vadd.f32 0.0, %v346
        %v348 = vpop.f32.mrf.mxu0
        %349 = vdwg.mxu0
        %350 = vmatprep.subr.mxu0 0.0
        %351 = vmatpush1.xpose.msra.mxu0 0.0
        %352 = vmatprep.subr.mxu0 0.0
        %353 = vmatpush1.xpose.msra.mxu0 0.0
        %354 = vmatprep.subr.mxu0 0.0
        %355 = vmatpush1.xpose.msra.mxu0 0.0
        %356 = vmatprep.subr.mxu0 0.0
        %357 = vmatpush1.xpose.msra.mxu0 0.0
        %358 = vmatprep.subr.mxu0 0.0
        %359 = vmatpush1.xpose.msra.mxu0 0.0
        %360 = vmatprep.subr.mxu0 0.0
        %361 = vmatpush1.xpose.msra.mxu0 0.0
        %362 = vmatprep.subr.mxu0 0.0
        %363 = vmatpush1.xpose.msra.mxu0 0.0
        %364 = vmatprep.subr.mxu0 0.0
        %365 = vmatpush1.xpose.msra.mxu0 0.0
        %366 = vmatprep.subr.mxu0 0.0
        %367 = vmatpush1.xpose.msra.mxu0 0.0
        %368 = vmatprep.subr.mxu0 0.0
        %369 = vmatpush1.xpose.msra.mxu0 0.0
        %370 = vmatprep.subr.mxu0 0.0
        %371 = vmatpush1.xpose.msra.mxu0 0.0
        %372 = vmatprep.subr.mxu0 0.0
        %373 = vmatpush1.xpose.msra.mxu0 0.0
        %374 = vmatprep.subr.mxu0 0.0
        %375 = vmatpush1.xpose.msra.mxu0 0.0
        %376 = vmatprep.subr.mxu0 0.0
        %377 = vmatpush1.xpose.msra.mxu0 0.0
        %378 = vmatprep.subr.mxu0 0.0
        %379 = vmatpush1.xpose.msra.mxu0 0.0
        %380 = vmatprep.subr.mxu0 0.0
        %381 = vmatpush1.xpose.msra.mxu0 %v278
        %382 = vmatprep.subr.mxu0 0.0
        %383 = vmatpush2.xpose.msra.mxu0 0.0
        %384 = vmatprep.subr.mxu0 0.0
        %385 = vmatpush2.xpose.msra.mxu0 0.0
        %386 = vmatprep.subr.mxu0 0.0
        %387 = vmatpush2.xpose.msra.mxu0 0.0
        %388 = vmatprep.subr.mxu0 0.0
        %389 = vmatpush2.xpose.msra.mxu0 0.0
        %390 = vmatprep.subr.mxu0 0.0
        %391 = vmatpush2.xpose.msra.mxu0 0.0
        %392 = vmatprep.subr.mxu0 0.0
        %393 = vmatpush2.xpose.msra.mxu0 0.0
        %394 = vmatprep.subr.mxu0 0.0
        %395 = vmatpush2.xpose.msra.mxu0 0.0
        %396 = vmatprep.subr.mxu0 0.0
        %397 = vmatpush2.xpose.msra.mxu0 0.0
        %398 = vmatprep.subr.mxu0 0.0
        %399 = vmatpush2.xpose.msra.mxu0 0.0
        %400 = vmatprep.subr.mxu0 0.0
        %401 = vmatpush2.xpose.msra.mxu0 0.0
        %402 = vmatprep.subr.mxu0 0.0
        %403 = vmatpush2.xpose.msra.mxu0 0.0
        %404 = vmatprep.subr.mxu0 0.0
        %405 = vmatpush2.xpose.msra.mxu0 0.0
        %406 = vmatprep.subr.mxu0 0.0
        %407 = vmatpush2.xpose.msra.mxu0 0.0
        %408 = vmatprep.subr.mxu0 0.0
        %409 = vmatpush2.xpose.msra.mxu0 0.0
        %410 = vmatprep.subr.mxu0 0.0
        %411 = vmatpush2.xpose.msra.mxu0 0.0
        %412 = vmatprep.subr.mxu0 0.0
        %413 = vmatpush2.xpose.msra.mxu0 0.0
        %414 = vmatprep.mubr.f32.mxu0 0.0
        %415 = vmatmul.mubr.f32.gmra.mxu0 %v276
        %v416 = vpop.f32.mrf.mxu0
        %v417 = vadd.f32 0.0, %v416
        %v418 = vpop.f32.mrf.mxu0
        %419 = vdwg.mxu0
        %v420 = vsel %vm195, %v417, -1e+30
        %v421 = vsel %vm205, %v420, -inf
        %v422 = vrot.slane %v421, 4
        %v423 = vmax.f32 %v421, %v422
        %v424 = vrot.slane %v423, 2
        %v425 = vmax.f32 %v423, %v424
        %v426 = vrot.slane %v425, 1
        %v427 = vmax.f32 %v425, %v426
        %v428 = vsub.f32 %v420, %v427
        %v429 = vmul.f32 %v428, 1.442695
        %v430 = vpow.pop %v429
        %v431 = vsel %vm205, %v430, 0.0
        %v432 = vrot.slane %v431, 4
        %v433 = vadd.f32 %v431, %v432
        %v434 = vrot.slane %v433, 2
        %v435 = vadd.f32 %v433, %v434
        %v436 = vrot.slane %v435, 1
        %v437 = vadd.f32 %v435, %v436
        %438 = vxpose.xlu0.b32.start [1/16] %v437, 128
        %439 = vxpose.xlu0.b32.cont [2/16] 0.0, 128
        %440 = vxpose.xlu0.b32.cont [3/16] 0.0, 128
        %441 = vxpose.xlu0.b32.cont [4/16] 0.0, 128
        %442 = vxpose.xlu0.b32.cont [5/16] 0.0, 128
        %443 = vxpose.xlu0.b32.cont [6/16] 0.0, 128
        %444 = vxpose.xlu0.b32.cont [7/16] 0.0, 128
        %445 = vxpose.xlu0.b32.cont [8/16] 0.0, 128
        %446 = vxpose.xlu0.b32.cont [9/16] 0.0, 128
        %447 = vxpose.xlu0.b32.cont [10/16] 0.0, 128
        %448 = vxpose.xlu0.b32.cont [11/16] 0.0, 128
        %449 = vxpose.xlu0.b32.cont [12/16] 0.0, 128
        %450 = vxpose.xlu0.b32.cont [13/16] 0.0, 128
        %451 = vxpose.xlu0.b32.cont [14/16] 0.0, 128
        %452 = vxpose.xlu0.b32.cont [15/16] 0.0, 128
        %453 = vxpose.xlu0.b32.end [16/16] 0.0, 128
        %v454 = vpop.trf.xlu0
        %v455 = vpop.trf.xlu0
        %v456 = vpop.trf.xlu0
        %v457 = vpop.trf.xlu0
        %v458 = vpop.trf.xlu0
        %v459 = vpop.trf.xlu0
        %v460 = vpop.trf.xlu0
        %v461 = vpop.trf.xlu0
        %v462 = vpop.trf.xlu0
        %v463 = vpop.trf.xlu0
        %v464 = vpop.trf.xlu0
        %v465 = vpop.trf.xlu0
        %v466 = vpop.trf.xlu0
        %v467 = vpop.trf.xlu0
        %v468 = vpop.trf.xlu0
        %v469 = vpop.trf.xlu0
        %v470 = vrcp.pop %v454
        %v471 = vmul.f32 1.0, %v470
        %473 = vset.pattern.permute.xlu0 0
        %474 = vperm.xlu0 %473, %v471
        %v475 = vpop.permute.xlu0 %474
        %v477 = vmul.f32 %v347, %v475
        %v479 = vsel %vm205, %v430, 0
        %481 = vmatprep.subr.mxu0 0.0
        %482 = vmatpush1.msra.mxu0 0.0
        %483 = vmatprep.subr.mxu0 0.0
        %484 = vmatpush1.msra.mxu0 0.0
        %485 = vmatprep.subr.mxu0 0.0
        %486 = vmatpush1.msra.mxu0 0.0
        %487 = vmatprep.subr.mxu0 0.0
        %488 = vmatpush1.msra.mxu0 0.0
        %489 = vmatprep.subr.mxu0 0.0
        %490 = vmatpush1.msra.mxu0 0.0
        %491 = vmatprep.subr.mxu0 0.0
        %492 = vmatpush1.msra.mxu0 0.0
        %493 = vmatprep.subr.mxu0 0.0
        %494 = vmatpush1.msra.mxu0 0.0
        %495 = vmatprep.subr.mxu0 0.0
        %496 = vmatpush1.msra.mxu0 0.0
        %497 = vmatprep.subr.mxu0 0.0
        %498 = vmatpush1.msra.mxu0 0.0
        %499 = vmatprep.subr.mxu0 0.0
        %500 = vmatpush1.msra.mxu0 0.0
        %501 = vmatprep.subr.mxu0 0.0
        %502 = vmatpush1.msra.mxu0 0.0
        %503 = vmatprep.subr.mxu0 0.0
        %504 = vmatpush1.msra.mxu0 0.0
        %505 = vmatprep.subr.mxu0 0.0
        %506 = vmatpush1.msra.mxu0 0.0
        %507 = vmatprep.subr.mxu0 0.0
        %508 = vmatpush1.msra.mxu0 0.0
        %509 = vmatprep.subr.mxu0 0.0
        %510 = vmatpush1.msra.mxu0 0.0
        %511 = vmatprep.subr.mxu0 0.0
        %512 = vmatpush1.msra.mxu0 %v477
        %513 = vmatprep.subr.mxu0 0.0
        %514 = vmatpush2.msra.mxu0 0.0
        %515 = vmatprep.subr.mxu0 0.0
        %516 = vmatpush2.msra.mxu0 0.0
        %517 = vmatprep.subr.mxu0 0.0
        %518 = vmatpush2.msra.mxu0 0.0
        %519 = vmatprep.subr.mxu0 0.0
        %520 = vmatpush2.msra.mxu0 0.0
        %521 = vmatprep.subr.mxu0 0.0
        %522 = vmatpush2.msra.mxu0 0.0
        %523 = vmatprep.subr.mxu0 0.0
        %524 = vmatpush2.msra.mxu0 0.0
        %525 = vmatprep.subr.mxu0 0.0
        %526 = vmatpush2.msra.mxu0 0.0
        %527 = vmatprep.subr.mxu0 0.0
        %528 = vmatpush2.msra.mxu0 0.0
        %529 = vmatprep.subr.mxu0 0.0
        %530 = vmatpush2.msra.mxu0 0.0
        %531 = vmatprep.subr.mxu0 0.0
        %532 = vmatpush2.msra.mxu0 0.0
        %533 = vmatprep.subr.mxu0 0.0
        %534 = vmatpush2.msra.mxu0 0.0
        %535 = vmatprep.subr.mxu0 0.0
        %536 = vmatpush2.msra.mxu0 0.0
        %537 = vmatprep.subr.mxu0 0.0
        %538 = vmatpush2.msra.mxu0 0.0
        %539 = vmatprep.subr.mxu0 0.0
        %540 = vmatpush2.msra.mxu0 0.0
        %541 = vmatprep.subr.mxu0 0.0
        %542 = vmatpush2.msra.mxu0 0.0
        %543 = vmatprep.subr.mxu0 0.0
        %544 = vmatpush2.msra.mxu0 0.0
        %545 = vmatprep.mubr.f32.mxu0 0.0
        %546 = vmatmul.mubr.f32.gmra.mxu0 %v479
        %v547 = vpop.f32.mrf.mxu0
        %v548 = vadd.f32 0.0, %v547
        %v549 = vpop.f32.mrf.mxu0
        %550 = vdwg.mxu0
        %552 = vset.pattern.permute.xlu0 0
        %553 = vperm.xlu0 %552, %v454
        %v554 = vpop.permute.xlu0 %553
        %v556 = vmul.f32 %v548, %v554
        %s557 = scalar_lea.vmem %s180, %s202
        %558 = vst [vmem:[%s557] sm:$0xff] %v556
        %s559 = scalar_lea.vmem %s186, %s202
        %560 = vst [vmem:[%s559] sm:$0xff] %v554
      $region33: #{multihead_dilated_attention.2} parent=27 // loop_footer
        %s201 = sadd.s32 1, %s197
      $region34: #{multihead_dilated_attention.2} parent=27 // loop_footer_branch
        %196 = sbr.rel target = $region30
      $region35: #{multihead_dilated_attention.2} parent=27 // loop_exit
        _
      %s561 = smul.u32 2, %s15
      %p562 = scmp.lt.s32.totalorder %s561, 3
      %s563 = scalar_select %p562, %s561, 3
      %s564 = smul.addr %s563, 8
      %s565 = scalar_lea.vmem %s2, %s564
      %s566 = smul.u32 2, %s15
      %p567 = scmp.lt.s32.totalorder %s566, 3
      %s568 = scalar_select %p567, %s566, 3
      %s569 = smul.addr %s568, 8
      %s570 = scalar_lea.vmem %s3, %s569
      // Predicated region
      $region36: #{multihead_dilated_attention.2} parent=27 // pred_check
        %p571 = pneg %p80
      $region37: #{multihead_dilated_attention.2} parent=27 // pred_check_branch
        %573 = sbr.rel (%p571) target = $region39
      $region38: #{multihead_dilated_attention.2} parent=27 // pred_region
        %s574 = smul.u32 2, %s15
      $region39: #{multihead_dilated_attention.2} parent=27 // pred_fallthru
        _
      // Predicated region
      $region40: #{multihead_dilated_attention.2} parent=27 // pred_check
        %p575 = pneg %p106
      $region41: #{multihead_dilated_attention.2} parent=27 // pred_check_branch
        %577 = sbr.rel (%p575) target = $region43
      $region42: #{multihead_dilated_attention.2} parent=27 // pred_region
        %s578 = smul.u32 2, %s15
      $region43: #{multihead_dilated_attention.2} parent=27 // pred_fallthru
        _
    $region28: #{multihead_dilated_attention.2} parent=5 // pred_fallthru
      _
    %p579 = scmp.le.s32.totalorder 2, %s10
    // Predicated region
    $region44: #{multihead_dilated_attention.2} parent=5 // pred_check
      %p580 = pneg %p579
    $region45: #{multihead_dilated_attention.2} parent=5 // pred_check_branch
      %582 = sbr.rel (%p580) target = $region47
    $region46: #{multihead_dilated_attention.2} parent=5 // pred_region
      %s583 = ssub.s32 %s10, 2
      // Predicated region
      $region48: #{multihead_dilated_attention.2} parent=46 // pred_check
        %p584 = pneg %p86
      $region49: #{multihead_dilated_attention.2} parent=46 // pred_check_branch
        %586 = sbr.rel (%p584) target = $region51
      $region50: #{multihead_dilated_attention.2} parent=46 // pred_region
        %s587 = smul.u32 2, %s16
        %p588 = scmp.lt.s32.totalorder %s587, 3
        %s589 = scalar_select %p588, %s587, 3
        %s590 = smul.addr %s589, 8
        %s591 = scalar_lea.vmem %s2, %s590
      $region51: #{multihead_dilated_attention.2} parent=46 // pred_fallthru
        _
      // Predicated region
      $region52: #{multihead_dilated_attention.2} parent=46 // pred_check
        %p592 = pneg %p112
      $region53: #{multihead_dilated_attention.2} parent=46 // pred_check_branch
        %594 = sbr.rel (%p592) target = $region55
      $region54: #{multihead_dilated_attention.2} parent=46 // pred_region
        %s595 = smul.u32 2, %s16
        %p596 = scmp.lt.s32.totalorder %s595, 3
        %s597 = scalar_select %p596, %s595, 3
        %s598 = smul.addr %s597, 8
        %s599 = scalar_lea.vmem %s3, %s598
      $region55: #{multihead_dilated_attention.2} parent=46 // pred_fallthru
        _
    $region47: #{multihead_dilated_attention.2} parent=5 // pred_fallthru
      _
  $region6: #{multihead_dilated_attention.2} parent=0 // loop_footer
    %s14 = sadd.s32 1, %s10
  $region7: #{multihead_dilated_attention.2} parent=0 // loop_footer_branch
    %9 = sbr.rel target = $region3
  $region8: #{multihead_dilated_attention.2} parent=0 // loop_exit
    _

</llo_original>
